<compile_context>
chip_gen: v7x
topology: tpu7x:2x2x1
jax: 0.10.0
libtpu: 0.0.40
codegen_flags: <defaults>
</compile_context>

<pallas_src>
import functools

import jax
import jax.numpy as jnp
from jax import lax
from jax.experimental import pallas as pl
from jax.experimental.pallas import tpu as pltpu

LEAKY_SLOPE = 0.01  # nn.LeakyReLU default negative_slope


def _actor_head_kernel(item_ref, ems_ref, w1t_ref, b1_ref, w2t_ref, b2_ref,
                       out_ref):
    # item_ref: (Bb, Ni, E)   ems_ref: (Bb, Ne, E)
    # w1t/w2t:  (E, E) pre-transposed so y = x @ Wt + b matches torch Linear
    # b1/b2:    (1, E)
    bb, ni, e = item_ref.shape
    _, ne, _ = ems_ref.shape

    # Fold the batch block into the matmul M dimension (leading-dim fold,
    # minor dim unchanged -> no relayout). One big matmul per layer.
    item2d = item_ref[...].reshape(bb * ni, e)
    ems2d = ems_ref[...].reshape(bb * ne, e)

    h1 = jnp.dot(item2d, w1t_ref[...], preferred_element_type=jnp.float32)
    h1 = h1 + b1_ref[...]
    h1 = jnp.maximum(h1, LEAKY_SLOPE * h1)          # layer_1 LeakyReLU

    h2 = jnp.dot(ems2d, w2t_ref[...], preferred_element_type=jnp.float32)
    h2 = h2 + b2_ref[...]
    h2 = jnp.maximum(h2, LEAKY_SLOPE * h2)          # layer_2 LeakyReLU

    h1_3d = h1.reshape(bb, ni, e)
    h2_3d = h2.reshape(bb, ne, e)

    # bmm(item, ems.permute(0, 2, 1)): batch dim 0, contract last dims of
    # both operands -> no explicit transpose of h2.
    out_ref[...] = lax.dot_general(
        h1_3d, h2_3d,
        dimension_numbers=(((2,), (2,)), ((0,), (0,))),
        preferred_element_type=jnp.float32,
    )


def _pick_block_batch(batch: int, requested: int) -> int:
    bb = max(1, min(requested, batch))
    # Keep grid length >= 2 when possible so v7x can shard the batch axis
    # across its 2 TensorCores.
    if batch > 1:
        bb = min(bb, pl.cdiv(batch, 2))
    return max(1, bb)


@functools.partial(jax.jit, static_argnames=("block_batch",))
def actor_head_forward(item_embedding, ems_embedding, w1, b1, w2, b2,
                       *, block_batch: int = 64):
    """item_embedding: (B, Ni, E), ems_embedding: (B, Ne, E).
    w1/w2 in PyTorch Linear layout (out_features, in_features) = (E, E).
    Returns logits of shape (B, Ni * Ne)."""
    B, Ni, E = item_embedding.shape
    _, Ne, _ = ems_embedding.shape

    # Glue (folded by jit): pre-transpose weights, lift biases to 2D.
    w1t = jnp.asarray(w1, jnp.float32).T
    w2t = jnp.asarray(w2, jnp.float32).T
    b1_2d = jnp.asarray(b1, jnp.float32).reshape(1, E)
    b2_2d = jnp.asarray(b2, jnp.float32).reshape(1, E)

    bb = _pick_block_batch(B, block_batch)
    grid = (pl.cdiv(B, bb),)

    logits3 = pl.pallas_call(
        _actor_head_kernel,
        out_shape=jax.ShapeDtypeStruct((B, Ni, Ne), jnp.float32),
        grid_spec=pltpu.PrefetchScalarGridSpec(
            num_scalar_prefetch=0,
            grid=grid,
            in_specs=[
                pl.BlockSpec((bb, Ni, E), lambda b: (b, 0, 0)),
                pl.BlockSpec((bb, Ne, E), lambda b: (b, 0, 0)),
                pl.BlockSpec((E, E), lambda b: (0, 0)),
                pl.BlockSpec((1, E), lambda b: (0, 0)),
                pl.BlockSpec((E, E), lambda b: (0, 0)),
                pl.BlockSpec((1, E), lambda b: (0, 0)),
            ],
            out_specs=pl.BlockSpec((bb, Ni, Ne), lambda b: (b, 0, 0)),
        ),
        compiler_params=pltpu.CompilerParams(
            dimension_semantics=("parallel",)),
    )(item_embedding, ems_embedding, w1t, b1_2d, w2t, b2_2d)

    # logits.reshape(batch_size, -1) — trailing-dim fold, free under jit.
    return logits3.reshape(B, Ni * Ne)


def _orthogonal(key, n, gain):
    # Deterministic orthogonal init (mirrors nn.init.orthogonal_ semantics).
    a = jax.random.normal(key, (n, n), dtype=jnp.float32)
    q, r = jnp.linalg.qr(a)
    q = q * jnp.sign(jnp.diag(r))[None, :]
    return gain * q


def _reference(item, ems, w1, b1, w2, b2):
    def leaky(x):
        return jnp.where(x >= 0, x, LEAKY_SLOPE * x)
    h1 = leaky(jnp.einsum("bne,oe->bno", item, w1) + b1)
    h2 = leaky(jnp.einsum("bne,oe->bno", ems, w2) + b2)
    logits = jnp.einsum("bie,bje->bij", h1, h2)
    return logits.reshape(item.shape[0], -1)


if __name__ == "__main__":
    B, Ni, Ne, E = 16, 8, 6, 32  # batch, item tokens, ems tokens, embed_size

    key = jax.random.PRNGKey(0)
    k_item, k_ems, k_w1, k_w2 = jax.random.split(key, 4)

    item_embedding = jax.random.normal(k_item, (B, Ni, E), dtype=jnp.float32)
    ems_embedding = jax.random.normal(k_ems, (B, Ne, E), dtype=jnp.float32)

    gain = float(jnp.sqrt(2.0 / (1.0 + LEAKY_SLOPE ** 2)))  # calculate_gain('leaky_relu')
    w1 = _orthogonal(k_w1, E, gain)   # (out, in) torch Linear layout
    w2 = _orthogonal(k_w2, E, gain)
    b1 = jnp.zeros((E,), jnp.float32)  # constant_(0)
    b2 = jnp.zeros((E,), jnp.float32)

    logits = actor_head_forward(item_embedding, ems_embedding, w1, b1, w2, b2)
    logits = jax.block_until_ready(logits)

    ref = _reference(item_embedding, ems_embedding, w1, b1, w2, b2)
    assert logits.shape == (B, Ni * Ne)
    assert jnp.allclose(logits, ref, rtol=1e-5, atol=1e-5)

    print("KERNEL_OK")
</pallas_src>

<mosaic_0001>
module attributes {stable_mosaic.version = 11 : i64} {
  func.func @_actor_head_kernel(%arg0: i32, %arg1: memref<8x8x32xf32, #tpu.memory_space<vmem>>, %arg2: memref<8x6x32xf32, #tpu.memory_space<vmem>>, %arg3: memref<32x32xf32, #tpu.memory_space<vmem>>, %arg4: memref<1x32xf32, #tpu.memory_space<vmem>>, %arg5: memref<32x32xf32, #tpu.memory_space<vmem>>, %arg6: memref<1x32xf32, #tpu.memory_space<vmem>>, %arg7: memref<8x8x6xf32, #tpu.memory_space<vmem>>) attributes {dimension_semantics = [#tpu.dimension_semantics<parallel>], iteration_bounds = array<i64: 2>, scalar_prefetch = 0 : i64, scratch_operands = 0 : i64, tpu.core_type = #tpu.core_type<tc>, window_params = [{transform_indices = @transform_0, window_bounds = array<i64: 8, 8, 32>}, {transform_indices = @transform_1, window_bounds = array<i64: 8, 6, 32>}, {pipeline_mode = #tpu.pipeline_mode<synchronous>, transform_indices = @transform_2, window_bounds = array<i64: 32, 32>}, {pipeline_mode = #tpu.pipeline_mode<synchronous>, transform_indices = @transform_3, window_bounds = array<i64: 1, 32>}, {pipeline_mode = #tpu.pipeline_mode<synchronous>, transform_indices = @transform_4, window_bounds = array<i64: 32, 32>}, {pipeline_mode = #tpu.pipeline_mode<synchronous>, transform_indices = @transform_5, window_bounds = array<i64: 1, 32>}, {transform_indices = @transform_6, window_bounds = array<i64: 8, 8, 6>}]} {
    %c0 = arith.constant 0 : index
    %c0_0 = arith.constant 0 : index
    %c0_1 = arith.constant 0 : index
    %0 = vector.load %arg1[%c0, %c0_0, %c0_1] : memref<8x8x32xf32, #tpu.memory_space<vmem>>, vector<8x8x32xf32>
    %1 = vector.shape_cast %0 : vector<8x8x32xf32> to vector<64x32xf32>
    %c0_2 = arith.constant 0 : index
    %c0_3 = arith.constant 0 : index
    %c0_4 = arith.constant 0 : index
    %2 = vector.load %arg2[%c0_2, %c0_3, %c0_4] : memref<8x6x32xf32, #tpu.memory_space<vmem>>, vector<8x6x32xf32>
    %3 = vector.shape_cast %2 : vector<8x6x32xf32> to vector<48x32xf32>
    %c0_5 = arith.constant 0 : index
    %c0_6 = arith.constant 0 : index
    %4 = vector.load %arg3[%c0_5, %c0_6] : memref<32x32xf32, #tpu.memory_space<vmem>>, vector<32x32xf32>
    %cst = arith.constant dense<0.000000e+00> : vector<64x32xf32>
    %5 = tpu.matmul %1, %4, %cst {dimension_numbers = #tpu.dot_dimension_numbers<[1], [0], [0], [1], [0, 0, 1, 1], [], []>} : vector<64x32xf32>, vector<32x32xf32>, vector<64x32xf32> -> vector<64x32xf32>
    %c0_7 = arith.constant 0 : index
    %c0_8 = arith.constant 0 : index
    %6 = vector.load %arg4[%c0_7, %c0_8] : memref<1x32xf32, #tpu.memory_space<vmem>>, vector<1x32xf32>
    %7 = vector.broadcast %6 : vector<1x32xf32> to vector<64x32xf32>
    %8 = arith.addf %5, %7 : vector<64x32xf32>
    %cst_9 = arith.constant 0.00999999977 : f32
    %9 = vector.broadcast %cst_9 : f32 to vector<64x32xf32>
    %10 = arith.mulf %9, %8 : vector<64x32xf32>
    %11 = arith.maximumf %8, %10 : vector<64x32xf32>
    %c0_10 = arith.constant 0 : index
    %c0_11 = arith.constant 0 : index
    %12 = vector.load %arg5[%c0_10, %c0_11] : memref<32x32xf32, #tpu.memory_space<vmem>>, vector<32x32xf32>
    %cst_12 = arith.constant dense<0.000000e+00> : vector<48x32xf32>
    %13 = tpu.matmul %3, %12, %cst_12 {dimension_numbers = #tpu.dot_dimension_numbers<[1], [0], [0], [1], [0, 0, 1, 1], [], []>} : vector<48x32xf32>, vector<32x32xf32>, vector<48x32xf32> -> vector<48x32xf32>
    %c0_13 = arith.constant 0 : index
    %c0_14 = arith.constant 0 : index
    %14 = vector.load %arg6[%c0_13, %c0_14] : memref<1x32xf32, #tpu.memory_space<vmem>>, vector<1x32xf32>
    %15 = vector.broadcast %14 : vector<1x32xf32> to vector<48x32xf32>
    %16 = arith.addf %13, %15 : vector<48x32xf32>
    %cst_15 = arith.constant 0.00999999977 : f32
    %17 = vector.broadcast %cst_15 : f32 to vector<48x32xf32>
    %18 = arith.mulf %17, %16 : vector<48x32xf32>
    %19 = arith.maximumf %16, %18 : vector<48x32xf32>
    %20 = vector.shape_cast %11 : vector<64x32xf32> to vector<8x8x32xf32>
    %21 = vector.shape_cast %19 : vector<48x32xf32> to vector<8x6x32xf32>
    %cst_16 = arith.constant dense<0.000000e+00> : vector<8x8x6xf32>
    %22 = tpu.matmul %20, %21, %cst_16 {dimension_numbers = #tpu.dot_dimension_numbers<[2], [2], [1], [1], [0, 0, 0, 1, 1, 1], [0], [0]>} : vector<8x8x32xf32>, vector<8x6x32xf32>, vector<8x8x6xf32> -> vector<8x8x6xf32>
    %c0_17 = arith.constant 0 : index
    %c0_18 = arith.constant 0 : index
    %c0_19 = arith.constant 0 : index
    %23 = vector.load %arg7[%c0_17, %c0_18, %c0_19] : memref<8x8x6xf32, #tpu.memory_space<vmem>>, vector<8x8x6xf32>
    tpu.vector_store %arg7[%c0_17, %c0_18, %c0_19], %22 {strides = array<i32>} : memref<8x8x6xf32, #tpu.memory_space<vmem>>, vector<8x8x6xf32>,
    return
  }
  func.func @transform_0(%arg0: i32) -> (i32, i32, i32) {
    %c0_i32 = arith.constant 0 : i32
    %c0_i32_0 = arith.constant 0 : i32
    %c0_i32_1 = arith.constant 0 : i32
    return %arg0, %c0_i32, %c0_i32_0 : i32, i32, i32
  }
  func.func @transform_1(%arg0: i32) -> (i32, i32, i32) {
    %c0_i32 = arith.constant 0 : i32
    %c0_i32_0 = arith.constant 0 : i32
    %c0_i32_1 = arith.constant 0 : i32
    return %arg0, %c0_i32, %c0_i32_0 : i32, i32, i32
  }
  func.func @transform_2(%arg0: i32) -> (i32, i32) {
    %c0_i32 = arith.constant 0 : i32
    %c0_i32_0 = arith.constant 0 : i32
    %c0_i32_1 = arith.constant 0 : i32
    return %c0_i32, %c0_i32_0 : i32, i32
  }
  func.func @transform_3(%arg0: i32) -> (i32, i32) {
    %c0_i32 = arith.constant 0 : i32
    %c0_i32_0 = arith.constant 0 : i32
    %c0_i32_1 = arith.constant 0 : i32
    return %c0_i32, %c0_i32_0 : i32, i32
  }
  func.func @transform_4(%arg0: i32) -> (i32, i32) {
    %c0_i32 = arith.constant 0 : i32
    %c0_i32_0 = arith.constant 0 : i32
    %c0_i32_1 = arith.constant 0 : i32
    return %c0_i32, %c0_i32_0 : i32, i32
  }
  func.func @transform_5(%arg0: i32) -> (i32, i32) {
    %c0_i32 = arith.constant 0 : i32
    %c0_i32_0 = arith.constant 0 : i32
    %c0_i32_1 = arith.constant 0 : i32
    return %c0_i32, %c0_i32_0 : i32, i32
  }
  func.func @transform_6(%arg0: i32) -> (i32, i32, i32) {
    %c0_i32 = arith.constant 0 : i32
    %c0_i32_0 = arith.constant 0 : i32
    %c0_i32_1 = arith.constant 0 : i32
    return %arg0, %c0_i32, %c0_i32_0 : i32, i32, i32
  }
}

</mosaic_0001>

<llo_original>
// kernel: actor_head_forward.1
$region0: #{actor_head_forward.1}
  #allocation0 [shape = 'u32[]', space=smem, size = 0x4, offset = 0x4, fixed_abs, tag = 'smem constant byte address 0x4 - core index']
  #allocation1 [shape = 'u32[144,128]{1,0:T(1,128)}', space=vmem, size = 0x12000, scoped, tag = 'internal scratch']
  %s0 = inlined_call_operand.vmem [shape: f32[16,8,32], index: 0, kind: input, shape index: {}]
  %s1 = inlined_call_operand.vmem [shape: f32[16,6,32], index: 1, kind: input, shape index: {}]
  %s2 = inlined_call_operand.vmem [shape: f32[32,32], index: 2, kind: input, shape index: {}]
  %s3 = inlined_call_operand.vmem [shape: f32[1,32], index: 3, kind: input, shape index: {}]
  %s4 = inlined_call_operand.vmem [shape: f32[32,32], index: 4, kind: input, shape index: {}]
  %s5 = inlined_call_operand.vmem [shape: f32[1,32], index: 5, kind: input, shape index: {}]
  %s6 = inlined_call_operand.vmem [shape: f32[16,8,6], index: 6, kind: output, shape index: {}]
  %s7 = sld [smem:[#allocation0]]
  $region57: #{actor_head_forward.1} parent=0
    _
  %s9 = ssub.s32 1, %s7
  %s10 = scalar_select 0, %s9, %s7
  loop: start=0, step=1, limit=4
  $region2: #{actor_head_forward.1} parent=0 // loop_pre_header
    _
  $region3: #{actor_head_forward.1} parent=0 // loop_header
    %s12 = sphi 0, %s16
    %p13 = scmp.ge.s32.totalorder %s12, 4
    %s22 = sphi 0, %s24
    %s25 = sphi 0, %s22
    %s26 = sphi 0, %s25
    %s42 = sphi 0, %s26
    %s48 = sphi 0, %s50
    %s51 = sphi 0, %s48
    %s52 = sphi 0, %s51
    %s68 = sphi 0, %s52
    %s72 = sphi 0, %s72
    %s74 = sphi 0, %s72
    %s75 = sphi 0, %s74
    %s89 = sphi 0, %s75
    %s93 = sphi 0, %s93
    %s95 = sphi 0, %s93
    %s96 = sphi 0, %s95
    %s110 = sphi 0, %s96
    %s114 = sphi 0, %s114
    %s116 = sphi 0, %s114
    %s117 = sphi 0, %s116
    %s131 = sphi 0, %s117
    %s135 = sphi 0, %s135
    %s137 = sphi 0, %s135
    %s138 = sphi 0, %s137
    %s152 = sphi 0, %s138
    %s158 = sphi 0, %s160
    %s161 = sphi 0, %s158
    %s162 = sphi 0, %s161
    %s178 = sphi 0, %s162
  $region4: #{actor_head_forward.1} parent=0 // loop_header_branch
    %15 = sbr.rel (%p13) target = $region8
  $region5: #{actor_head_forward.1} parent=0 // loop_body
    %s17 = ssub.s32 %s12, 1
    %s18 = ssub.s32 %s12, 2
    %s19 = sadd.s32 %s12, 1
    %s20 = ssub.s32 %s12, %s19
    %p21 = scmp.eq.s32.totalorder %s20, 0
    %s23 = sadd.s32 %s22, 1
    %s24 = scalar_select %p21, %s22, %s23
    %p27 = pneg %p21
    %p28 = scmp.eq.s32.totalorder %s12, 1
    %p29 = por %p27, %p28
    %p30 = scmp.ne.s32.totalorder %s22, %s25
    %p31 = scmp.eq.s32.totalorder %s12, 0
    %p32 = por %p30, %p31
    %p33 = scmp.ne.s32.totalorder %s22, %s25
    %p34 = scmp.eq.s32.totalorder %s17, 1
    %p35 = por %p33, %p34
    %p36 = scmp.ne.s32.totalorder %s25, %s26
    %p37 = scmp.eq.s32.totalorder %s17, 0
    %p38 = por %p36, %p37
    %p39 = scmp.ne.s32.totalorder %s25, %s26
    %p40 = scmp.eq.s32.totalorder %s18, 1
    %p41 = por %p39, %p40
    %p43 = scmp.ne.s32.totalorder %s26, %s42
    %p44 = scmp.eq.s32.totalorder %s18, 0
    %p45 = por %p43, %p44
    %s46 = ssub.s32 %s12, %s19
    %p47 = scmp.eq.s32.totalorder %s46, 0
    %s49 = sadd.s32 %s48, 1
    %s50 = scalar_select %p47, %s48, %s49
    %p53 = pneg %p47
    %p54 = scmp.eq.s32.totalorder %s12, 1
    %p55 = por %p53, %p54
    %p56 = scmp.ne.s32.totalorder %s48, %s51
    %p57 = scmp.eq.s32.totalorder %s12, 0
    %p58 = por %p56, %p57
    %p59 = scmp.ne.s32.totalorder %s48, %s51
    %p60 = scmp.eq.s32.totalorder %s17, 1
    %p61 = por %p59, %p60
    %p62 = scmp.ne.s32.totalorder %s51, %s52
    %p63 = scmp.eq.s32.totalorder %s17, 0
    %p64 = por %p62, %p63
    %p65 = scmp.ne.s32.totalorder %s51, %s52
    %p66 = scmp.eq.s32.totalorder %s18, 1
    %p67 = por %p65, %p66
    %p69 = scmp.ne.s32.totalorder %s52, %s68
    %p70 = scmp.eq.s32.totalorder %s18, 0
    %p71 = por %p69, %p70
    %s73 = sadd.s32 %s72, 1
    %p76 = scmp.eq.s32.totalorder %s12, 1
    %p77 = scmp.ne.s32.totalorder %s72, %s74
    %p78 = scmp.eq.s32.totalorder %s12, 0
    %p79 = por %p77, %p78
    %p80 = scmp.ne.s32.totalorder %s72, %s74
    %p81 = scmp.eq.s32.totalorder %s17, 1
    %p82 = por %p80, %p81
    %p83 = scmp.ne.s32.totalorder %s74, %s75
    %p84 = scmp.eq.s32.totalorder %s17, 0
    %p85 = por %p83, %p84
    %p86 = scmp.ne.s32.totalorder %s74, %s75
    %p87 = scmp.eq.s32.totalorder %s18, 1
    %p88 = por %p86, %p87
    %p90 = scmp.ne.s32.totalorder %s75, %s89
    %p91 = scmp.eq.s32.totalorder %s18, 0
    %p92 = por %p90, %p91
    %s94 = sadd.s32 %s93, 1
    %p97 = scmp.eq.s32.totalorder %s12, 1
    %p98 = scmp.ne.s32.totalorder %s93, %s95
    %p99 = scmp.eq.s32.totalorder %s12, 0
    %p100 = por %p98, %p99
    %p101 = scmp.ne.s32.totalorder %s93, %s95
    %p102 = scmp.eq.s32.totalorder %s17, 1
    %p103 = por %p101, %p102
    %p104 = scmp.ne.s32.totalorder %s95, %s96
    %p105 = scmp.eq.s32.totalorder %s17, 0
    %p106 = por %p104, %p105
    %p107 = scmp.ne.s32.totalorder %s95, %s96
    %p108 = scmp.eq.s32.totalorder %s18, 1
    %p109 = por %p107, %p108
    %p111 = scmp.ne.s32.totalorder %s96, %s110
    %p112 = scmp.eq.s32.totalorder %s18, 0
    %p113 = por %p111, %p112
    %s115 = sadd.s32 %s114, 1
    %p118 = scmp.eq.s32.totalorder %s12, 1
    %p119 = scmp.ne.s32.totalorder %s114, %s116
    %p120 = scmp.eq.s32.totalorder %s12, 0
    %p121 = por %p119, %p120
    %p122 = scmp.ne.s32.totalorder %s114, %s116
    %p123 = scmp.eq.s32.totalorder %s17, 1
    %p124 = por %p122, %p123
    %p125 = scmp.ne.s32.totalorder %s116, %s117
    %p126 = scmp.eq.s32.totalorder %s17, 0
    %p127 = por %p125, %p126
    %p128 = scmp.ne.s32.totalorder %s116, %s117
    %p129 = scmp.eq.s32.totalorder %s18, 1
    %p130 = por %p128, %p129
    %p132 = scmp.ne.s32.totalorder %s117, %s131
    %p133 = scmp.eq.s32.totalorder %s18, 0
    %p134 = por %p132, %p133
    %s136 = sadd.s32 %s135, 1
    %p139 = scmp.eq.s32.totalorder %s12, 1
    %p140 = scmp.ne.s32.totalorder %s135, %s137
    %p141 = scmp.eq.s32.totalorder %s12, 0
    %p142 = por %p140, %p141
    %p143 = scmp.ne.s32.totalorder %s135, %s137
    %p144 = scmp.eq.s32.totalorder %s17, 1
    %p145 = por %p143, %p144
    %p146 = scmp.ne.s32.totalorder %s137, %s138
    %p147 = scmp.eq.s32.totalorder %s17, 0
    %p148 = por %p146, %p147
    %p149 = scmp.ne.s32.totalorder %s137, %s138
    %p150 = scmp.eq.s32.totalorder %s18, 1
    %p151 = por %p149, %p150
    %p153 = scmp.ne.s32.totalorder %s138, %s152
    %p154 = scmp.eq.s32.totalorder %s18, 0
    %p155 = por %p153, %p154
    %s156 = ssub.s32 %s12, %s19
    %p157 = scmp.eq.s32.totalorder %s156, 0
    %s159 = sadd.s32 %s158, 1
    %s160 = scalar_select %p157, %s158, %s159
    %p163 = pneg %p157
    %p164 = scmp.eq.s32.totalorder %s12, 1
    %p165 = por %p163, %p164
    %p166 = scmp.ne.s32.totalorder %s158, %s161
    %p167 = scmp.eq.s32.totalorder %s12, 0
    %p168 = por %p166, %p167
    %p169 = scmp.ne.s32.totalorder %s158, %s161
    %p170 = scmp.eq.s32.totalorder %s17, 1
    %p171 = por %p169, %p170
    %p172 = scmp.ne.s32.totalorder %s161, %s162
    %p173 = scmp.eq.s32.totalorder %s17, 0
    %p174 = por %p172, %p173
    %p175 = scmp.ne.s32.totalorder %s161, %s162
    %p176 = scmp.eq.s32.totalorder %s18, 1
    %p177 = por %p175, %p176
    %p179 = scmp.ne.s32.totalorder %s162, %s178
    %p180 = scmp.eq.s32.totalorder %s18, 0
    %p181 = por %p179, %p180
    %p182 = scmp.le.s32.totalorder 1, %s12
    %p183 = scmp.lt.s32.totalorder %s12, 3
    %p184 = pnand %p182, %p183
    %p185 = pneg %p184
    // Predicated region
    $region9: #{actor_head_forward.1} parent=5 // pred_check
      _
    $region10: #{actor_head_forward.1} parent=5 // pred_check_branch
      %187 = sbr.rel (%p184) target = $region12
    $region11: #{actor_head_forward.1} parent=5 // pred_region
      %s188 = ssub.s32 %s12, 1
      // Predicated region
      $region13: #{actor_head_forward.1} parent=11 // pred_check
        %p189 = pneg %p85
      $region14: #{actor_head_forward.1} parent=11 // pred_check_branch
        %191 = sbr.rel (%p189) target = $region16
      $region15: #{actor_head_forward.1} parent=11 // pred_region
        _
      $region16: #{actor_head_forward.1} parent=11 // pred_fallthru
        _
      // Predicated region
      $region17: #{actor_head_forward.1} parent=11 // pred_check
        %p192 = pneg %p106
      $region18: #{actor_head_forward.1} parent=11 // pred_check_branch
        %194 = sbr.rel (%p192) target = $region20
      $region19: #{actor_head_forward.1} parent=11 // pred_region
        _
      $region20: #{actor_head_forward.1} parent=11 // pred_fallthru
        _
      // Predicated region
      $region21: #{actor_head_forward.1} parent=11 // pred_check
        %p195 = pneg %p127
      $region22: #{actor_head_forward.1} parent=11 // pred_check_branch
        %197 = sbr.rel (%p195) target = $region24
      $region23: #{actor_head_forward.1} parent=11 // pred_region
        _
      $region24: #{actor_head_forward.1} parent=11 // pred_fallthru
        _
      // Predicated region
      $region25: #{actor_head_forward.1} parent=11 // pred_check
        %p198 = pneg %p148
      $region26: #{actor_head_forward.1} parent=11 // pred_check_branch
        %200 = sbr.rel (%p198) target = $region28
      $region27: #{actor_head_forward.1} parent=11 // pred_region
        _
      $region28: #{actor_head_forward.1} parent=11 // pred_fallthru
        _
    $region12: #{actor_head_forward.1} parent=5 // pred_fallthru
      _
    %p201 = scmp.lt.s32.totalorder %s12, 2
    // Predicated region
    $region29: #{actor_head_forward.1} parent=5 // pred_check
      %p202 = pneg %p201
    $region30: #{actor_head_forward.1} parent=5 // pred_check_branch
      %204 = sbr.rel (%p202) target = $region32
    $region31: #{actor_head_forward.1} parent=5 // pred_region
      // Predicated region
      $region33: #{actor_head_forward.1} parent=31 // pred_check
        %p205 = pneg %p32
      $region34: #{actor_head_forward.1} parent=31 // pred_check_branch
        %207 = sbr.rel (%p205) target = $region36
      $region35: #{actor_head_forward.1} parent=31 // pred_region
        %s208 = smul.u32 8, %s12
        %p209 = scmp.lt.s32.totalorder %s208, 15
        %s210 = scalar_select %p209, %s208, 15
        %s211 = smul.addr %s210, 8
        %s212 = scalar_lea.vmem %s0, %s211
        %s213 = smul.u32 8, %s12
      $region36: #{actor_head_forward.1} parent=31 // pred_fallthru
        _
      // Predicated region
      $region37: #{actor_head_forward.1} parent=31 // pred_check
        %p214 = pneg %p58
      $region38: #{actor_head_forward.1} parent=31 // pred_check_branch
        %216 = sbr.rel (%p214) target = $region40
      $region39: #{actor_head_forward.1} parent=31 // pred_region
        %s217 = smul.u32 8, %s12
        %p218 = scmp.lt.s32.totalorder %s217, 15
        %s219 = scalar_select %p218, %s217, 15
        %s220 = smul.addr %s219, 8
        %s221 = scalar_lea.vmem %s1, %s220
        %s222 = smul.u32 8, %s12
      $region40: #{actor_head_forward.1} parent=31 // pred_fallthru
        _
    $region32: #{actor_head_forward.1} parent=5 // pred_fallthru
      _
    %p223 = scmp.le.s32.totalorder 1, %s12
    %p224 = scmp.lt.s32.totalorder %s12, 3
    %p225 = pnand %p223, %p224
    %p226 = pneg %p225
    // Predicated region
    $region41: #{actor_head_forward.1} parent=5 // pred_check
      _
    $region42: #{actor_head_forward.1} parent=5 // pred_check_branch
      %228 = sbr.rel (%p225) target = $region44
    $region43: #{actor_head_forward.1} parent=5 // pred_region
      %s229 = ssub.s32 %s12, 1
      %s230 = smul.u32 8, %s17
      %p231 = scmp.lt.s32.totalorder %s230, 15
      %s232 = scalar_select %p231, %s230, 15
      %s233 = smul.addr %s232, 8
      %s234 = scalar_lea.vmem %s0, %s233
      %p235 = pneg %p38
      %p236 = pneg %p35
      %s237 = smul.u32 8, %s17
      %p238 = scmp.lt.s32.totalorder %s237, 15
      %s239 = scalar_select %p238, %s237, 15
      %s240 = smul.addr %s239, 8
      %s241 = scalar_lea.vmem %s1, %s240
      %p242 = pneg %p64
      %p243 = pneg %p61
      %p244 = pneg %p85
      %p245 = pneg %p82
      %p246 = pneg %p106
      %p247 = pneg %p103
      %p248 = pneg %p127
      %p249 = pneg %p124
      %p250 = pneg %p148
      %p251 = pneg %p145
      %p252 = pneg %p174
      %p253 = pneg %p171
      %s254 = smul.u32 8, %s17
      %p255 = scmp.lt.s32.totalorder %s254, 15
      %s256 = scalar_select %p255, %s254, 15
      %s257 = smul.addr %s256, 8
      %s258 = scalar_lea.vmem %s6, %s257
      %s259 = smul.u32 8, %s17
      %p260 = scmp.lt.s32.totalorder %s259, 15
      %s261 = scalar_select %p260, %s259, 15
      %s262 = smul.addr %s261, 8
      %s263 = scalar_lea.vmem %s0, %s262
      %s264 = smul.u32 8, %s17
      %s265 = smul.u32 8, %s17
      %p266 = scmp.lt.s32.totalorder %s265, 15
      %s267 = scalar_select %p266, %s265, 15
      %s268 = smul.addr %s267, 8
      %s269 = scalar_lea.vmem %s1, %s268
      %s270 = smul.u32 8, %s17
      %s271 = smul.u32 8, %s17
      %p272 = scmp.lt.s32.totalorder %s271, 15
      %s273 = scalar_select %p272, %s271, 15
      %s274 = smul.addr %s273, 8
      %s275 = scalar_lea.vmem %s6, %s274
      %s276 = smul.u32 8, %s17
      %v277 = vld [vmem:[%s263] sm:$0xff]
      %v278 = vld [vmem:[%s263 + $0x8] sm:$0xff]
      %v279 = vld [vmem:[%s263 + $0x10] sm:$0xff]
      %v280 = vld [vmem:[%s263 + $0x18] sm:$0xff]
      %v281 = vld [vmem:[%s263 + $0x20] sm:$0xff]
      %v282 = vld [vmem:[%s263 + $0x28] sm:$0xff]
      %v283 = vld [vmem:[%s263 + $0x30] sm:$0xff]
      %v284 = vld [vmem:[%s263 + $0x38] sm:$0xff]
      %v285 = vld [vmem:[%s269] sm:$0x3f]
      %v286 = vld [vmem:[%s269 + $0x8] sm:$0x3f]
      %v287 = vld [vmem:[%s269 + $0x10] sm:$0x3f]
      %v288 = vld [vmem:[%s269 + $0x18] sm:$0x3f]
      %v289 = vld [vmem:[%s269 + $0x20] sm:$0x3f]
      %v290 = vld [vmem:[%s269 + $0x28] sm:$0x3f]
      %v291 = vld [vmem:[%s269 + $0x30] sm:$0x3f]
      %v292 = vld [vmem:[%s269 + $0x38] sm:$0x3f]
      %v301 = vcombine.high %v285, %v285
      %v303 = vunpack.c.l.s4 1983009808
      %v304 = vunpack.c.0.s8 %v303
      %v305 = vlaneseq
      %v306 = vshrl.u32 %v305, 7
      %v307 = vsub.s32 %v304, %v306
      %v308 = vrot.slane %v285, %v307
      %v310 = vunpack.c.l.s4 1983009808
      %v311 = vunpack.c.0.s8 %v310
      %v312 = vlaneseq
      %v313 = vshrl.u32 %v312, 7
      %v314 = vsub.s32 %v311, %v313
      %v315 = vrot.slane %v301, %v314
      %v316 = vcombine.high %v308, %v308
      %v317 = vcombine.high %v286, %v286
      %v319 = vunpack.c.l.s4 1983009808
      %v320 = vunpack.c.0.s8 %v319
      %v321 = vlaneseq
      %v322 = vshrl.u32 %v321, 7
      %v323 = vsub.s32 %v320, %v322
      %v324 = vrot.slane %v286, %v323
      %v326 = vunpack.c.l.s4 1983009808
      %v327 = vunpack.c.0.s8 %v326
      %v328 = vlaneseq
      %v329 = vshrl.u32 %v328, 7
      %v330 = vsub.s32 %v327, %v329
      %v331 = vrot.slane %v317, %v330
      %v332 = vcombine.high %v324, %v324
      %v333 = vcombine.high %v287, %v287
      %v335 = vunpack.c.l.s4 1983009808
      %v336 = vunpack.c.0.s8 %v335
      %v337 = vlaneseq
      %v338 = vshrl.u32 %v337, 7
      %v339 = vsub.s32 %v336, %v338
      %v340 = vrot.slane %v287, %v339
      %v342 = vunpack.c.l.s4 1983009808
      %v343 = vunpack.c.0.s8 %v342
      %v344 = vlaneseq
      %v345 = vshrl.u32 %v344, 7
      %v346 = vsub.s32 %v343, %v345
      %v347 = vrot.slane %v333, %v346
      %v348 = vcombine.high %v340, %v340
      %v349 = vcombine.high %v288, %v288
      %v351 = vunpack.c.l.s4 1983009808
      %v352 = vunpack.c.0.s8 %v351
      %v353 = vlaneseq
      %v354 = vshrl.u32 %v353, 7
      %v355 = vsub.s32 %v352, %v354
      %v356 = vrot.slane %v288, %v355
      %v358 = vunpack.c.l.s4 1983009808
      %v359 = vunpack.c.0.s8 %v358
      %v360 = vlaneseq
      %v361 = vshrl.u32 %v360, 7
      %v362 = vsub.s32 %v359, %v361
      %v363 = vrot.slane %v349, %v362
      %v364 = vcombine.high %v356, %v356
      %v365 = vcombine.high %v289, %v289
      %v367 = vunpack.c.l.s4 1983009808
      %v368 = vunpack.c.0.s8 %v367
      %v369 = vlaneseq
      %v370 = vshrl.u32 %v369, 7
      %v371 = vsub.s32 %v368, %v370
      %v372 = vrot.slane %v289, %v371
      %v374 = vunpack.c.l.s4 1983009808
      %v375 = vunpack.c.0.s8 %v374
      %v376 = vlaneseq
      %v377 = vshrl.u32 %v376, 7
      %v378 = vsub.s32 %v375, %v377
      %v379 = vrot.slane %v365, %v378
      %v380 = vcombine.high %v372, %v372
      %v381 = vcombine.high %v290, %v290
      %v383 = vunpack.c.l.s4 1983009808
      %v384 = vunpack.c.0.s8 %v383
      %v385 = vlaneseq
      %v386 = vshrl.u32 %v385, 7
      %v387 = vsub.s32 %v384, %v386
      %v388 = vrot.slane %v290, %v387
      %v390 = vunpack.c.l.s4 1983009808
      %v391 = vunpack.c.0.s8 %v390
      %v392 = vlaneseq
      %v393 = vshrl.u32 %v392, 7
      %v394 = vsub.s32 %v391, %v393
      %v395 = vrot.slane %v381, %v394
      %v396 = vcombine.high %v388, %v388
      %v397 = vcombine.high %v291, %v291
      %v399 = vunpack.c.l.s4 1983009808
      %v400 = vunpack.c.0.s8 %v399
      %v401 = vlaneseq
      %v402 = vshrl.u32 %v401, 7
      %v403 = vsub.s32 %v400, %v402
      %v404 = vrot.slane %v291, %v403
      %v406 = vunpack.c.l.s4 1983009808
      %v407 = vunpack.c.0.s8 %v406
      %v408 = vlaneseq
      %v409 = vshrl.u32 %v408, 7
      %v410 = vsub.s32 %v407, %v409
      %v411 = vrot.slane %v397, %v410
      %v412 = vcombine.high %v404, %v404
      %v413 = vcombine.high %v292, %v292
      %v415 = vunpack.c.l.s4 1983009808
      %v416 = vunpack.c.0.s8 %v415
      %v417 = vlaneseq
      %v418 = vshrl.u32 %v417, 7
      %v419 = vsub.s32 %v416, %v418
      %v420 = vrot.slane %v292, %v419
      %v422 = vunpack.c.l.s4 1983009808
      %v423 = vunpack.c.0.s8 %v422
      %v424 = vlaneseq
      %v425 = vshrl.u32 %v424, 7
      %v426 = vsub.s32 %v423, %v425
      %v427 = vrot.slane %v413, %v426
      %v428 = vcombine.high %v420, %v420
      %v429 = vld [vmem:[%s2] sm:$0xff]
      %v430 = vld [vmem:[%s2 + $0x8] sm:$0xff]
      %v431 = vld [vmem:[%s2 + $0x10] sm:$0xff]
      %v432 = vld [vmem:[%s2 + $0x18] sm:$0xff]
      %v433 = vld [vmem:[%s3] sm:$0x1]
      %v435 = vlaneseq
      %v436 = vshrl.u32 %v435, 7
      %v437 = vsub.s32 0, %v436
      %v438 = vrot.slane %v433, %v437
      %vm440 = vcmask 261120
      %v442 = vsel %vm440, %v277, 0
      %v445 = vsel %vm440, %v278, 0
      %v448 = vsel %vm440, %v279, 0
      %v451 = vsel %vm440, %v280, 0
      %v454 = vsel %vm440, %v281, 0
      %v457 = vsel %vm440, %v282, 0
      %v460 = vsel %vm440, %v283, 0
      %v463 = vsel %vm440, %v284, 0
      %465 = vmatprep.subr.mxu0 0.0
      %466 = vmatpush1.msra.mxu0 %v429
      %467 = vmatprep.subr.mxu0 0.0
      %468 = vmatpush1.msra.mxu0 %v430
      %469 = vmatprep.subr.mxu0 0.0
      %470 = vmatpush1.msra.mxu0 %v431
      %471 = vmatprep.subr.mxu0 0.0
      %472 = vmatpush1.msra.mxu0 %v432
      %473 = vmatprep.subr.mxu0 0.0
      %474 = vmatpush1.msra.mxu0 0.0
      %475 = vmatprep.subr.mxu0 0.0
      %476 = vmatpush1.msra.mxu0 0.0
      %477 = vmatprep.subr.mxu0 0.0
      %478 = vmatpush1.msra.mxu0 0.0
      %479 = vmatprep.subr.mxu0 0.0
      %480 = vmatpush1.msra.mxu0 0.0
      %481 = vmatprep.subr.mxu0 0.0
      %482 = vmatpush1.msra.mxu0 0.0
      %483 = vmatprep.subr.mxu0 0.0
      %484 = vmatpush1.msra.mxu0 0.0
      %485 = vmatprep.subr.mxu0 0.0
      %486 = vmatpush1.msra.mxu0 0.0
      %487 = vmatprep.subr.mxu0 0.0
      %488 = vmatpush1.msra.mxu0 0.0
      %489 = vmatprep.subr.mxu0 0.0
      %490 = vmatpush1.msra.mxu0 0.0
      %491 = vmatprep.subr.mxu0 0.0
      %492 = vmatpush1.msra.mxu0 0.0
      %493 = vmatprep.subr.mxu0 0.0
      %494 = vmatpush1.msra.mxu0 0.0
      %495 = vmatprep.subr.mxu0 0.0
      %496 = vmatpush1.msra.mxu0 0.0
      %497 = vmatprep.subr.mxu0 0.0
      %498 = vmatpush1.msra.mxu0 0.0
      %499 = vmatprep.subr.mxu0 0.0
      %500 = vmatpush1.msra.mxu0 0.0
      %501 = vmatprep.subr.mxu0 0.0
      %502 = vmatpush1.msra.mxu0 0.0
      %503 = vmatprep.subr.mxu0 0.0
      %504 = vmatpush1.msra.mxu0 0.0
      %505 = vmatprep.subr.mxu0 0.0
      %506 = vmatpush1.msra.mxu0 0.0
      %507 = vmatprep.subr.mxu0 0.0
      %508 = vmatpush1.msra.mxu0 0.0
      %509 = vmatprep.subr.mxu0 0.0
      %510 = vmatpush1.msra.mxu0 0.0
      %511 = vmatprep.subr.mxu0 0.0
      %512 = vmatpush1.msra.mxu0 0.0
      %513 = vmatprep.subr.mxu0 0.0
      %514 = vmatpush1.msra.mxu0 0.0
      %515 = vmatprep.subr.mxu0 0.0
      %516 = vmatpush1.msra.mxu0 0.0
      %517 = vmatprep.subr.mxu0 0.0
      %518 = vmatpush1.msra.mxu0 0.0
      %519 = vmatprep.subr.mxu0 0.0
      %520 = vmatpush1.msra.mxu0 0.0
      %521 = vmatprep.subr.mxu0 0.0
      %522 = vmatpush1.msra.mxu0 0.0
      %523 = vmatprep.subr.mxu0 0.0
      %524 = vmatpush1.msra.mxu0 0.0
      %525 = vmatprep.subr.mxu0 0.0
      %526 = vmatpush1.msra.mxu0 0.0
      %527 = vmatprep.subr.mxu0 0.0
      %528 = vmatpush1.msra.mxu0 0.0
      %529 = vmatprep.mubr.f32.mxu0 0.0
      %530 = vmatmul.mubr.f32.gmra.mrb[0].mxu0 %v442
      %v531 = vpop.f32.mrb[0].mxu0
      %v532 = vadd.f32 %v438, %v531
      %v533 = vpop.f32.mrb[0].mxu0
      %534 = vmatprep.mubr.f32.mxu0 0.0
      %535 = vmatmul.mubr.f32.gmra.mrb[0].mxu0 %v445
      %v536 = vpop.f32.mrb[0].mxu0
      %v537 = vadd.f32 %v438, %v536
      %v538 = vpop.f32.mrb[0].mxu0
      %539 = vmatprep.mubr.f32.mxu0 0.0
      %540 = vmatmul.mubr.f32.gmra.mrb[0].mxu0 %v448
      %v541 = vpop.f32.mrb[0].mxu0
      %v542 = vadd.f32 %v438, %v541
      %v543 = vpop.f32.mrb[0].mxu0
      %544 = vmatprep.mubr.f32.mxu0 0.0
      %545 = vmatmul.mubr.f32.gmra.mrb[0].mxu0 %v451
      %v546 = vpop.f32.mrb[0].mxu0
      %v547 = vadd.f32 %v438, %v546
      %v548 = vpop.f32.mrb[0].mxu0
      %549 = vmatprep.mubr.f32.mxu0 0.0
      %550 = vmatmul.mubr.f32.gmra.mrb[0].mxu0 %v454
      %v551 = vpop.f32.mrb[0].mxu0
      %v552 = vadd.f32 %v438, %v551
      %v553 = vpop.f32.mrb[0].mxu0
      %554 = vmatprep.mubr.f32.mxu0 0.0
      %555 = vmatmul.mubr.f32.gmra.mrb[0].mxu0 %v457
      %v556 = vpop.f32.mrb[0].mxu0
      %v557 = vadd.f32 %v438, %v556
      %v558 = vpop.f32.mrb[0].mxu0
      %559 = vmatprep.mubr.f32.mxu0 0.0
      %560 = vmatmul.mubr.f32.gmra.mrb[0].mxu0 %v460
      %v561 = vpop.f32.mrb[0].mxu0
      %v562 = vadd.f32 %v438, %v561
      %v563 = vpop.f32.mrb[0].mxu0
      %564 = vmatprep.mubr.f32.mxu0 0.0
      %565 = vmatmul.mubr.f32.gmra.mrb[0].mxu0 %v463
      %v566 = vpop.f32.mrb[0].mxu0
      %v567 = vadd.f32 %v438, %v566
      %v568 = vpop.f32.mrb[0].mxu0
      %569 = vdwg.mxu0
      %v570 = vmul.f32 %v532, 0.01
      %v571 = vmul.f32 %v537, 0.01
      %v572 = vmul.f32 %v542, 0.01
      %v573 = vmul.f32 %v547, 0.01
      %v574 = vmul.f32 %v552, 0.01
      %v575 = vmul.f32 %v557, 0.01
      %v576 = vmul.f32 %v562, 0.01
      %v577 = vmul.f32 %v567, 0.01
      %v578 = vmax.f32 %v532, %v570
      %v579 = vmax.f32 %v537, %v571
      %v580 = vmax.f32 %v542, %v572
      %v581 = vmax.f32 %v547, %v573
      %v582 = vmax.f32 %v552, %v574
      %v583 = vmax.f32 %v557, %v575
      %v584 = vmax.f32 %v562, %v576
      %v585 = vmax.f32 %v567, %v577
      %v586 = vld [vmem:[%s4] sm:$0xff]
      %v587 = vld [vmem:[%s4 + $0x8] sm:$0xff]
      %v588 = vld [vmem:[%s4 + $0x10] sm:$0xff]
      %v589 = vld [vmem:[%s4 + $0x18] sm:$0xff]
      %v590 = vld [vmem:[%s5] sm:$0x1]
      %v592 = vlaneseq
      %v593 = vshrl.u32 %v592, 7
      %v594 = vsub.s32 0, %v593
      %v595 = vrot.slane %v590, %v594
      %v597 = vcombine.low %v308, %v316
      %v598 = vcombine.low %v315, %v324
      %v600 = vunpack.c.l.s4 1983009808
      %v601 = vunpack.c.0.s8 %v600
      %v602 = vlaneseq
      %v603 = vshrl.u32 %v602, 7
      %v604 = vsub.s32 %v601, %v603
      %v605 = vrot.slane %v597, %v604
      %v607 = vunpack.c.l.s4 1983009808
      %v608 = vunpack.c.0.s8 %v607
      %v609 = vlaneseq
      %v610 = vshrl.u32 %v609, 7
      %v611 = vsub.s32 %v608, %v610
      %v612 = vrot.slane %v598, %v611
      %v613 = vcombine.low %v605, %v612
      %v614 = vcombine.low %v332, %v331
      %v615 = vcombine.low %v340, %v348
      %v617 = vunpack.c.l.s4 1983009808
      %v618 = vunpack.c.0.s8 %v617
      %v619 = vlaneseq
      %v620 = vshrl.u32 %v619, 7
      %v621 = vsub.s32 %v618, %v620
      %v622 = vrot.slane %v614, %v621
      %v624 = vunpack.c.l.s4 1983009808
      %v625 = vunpack.c.0.s8 %v624
      %v626 = vlaneseq
      %v627 = vshrl.u32 %v626, 7
      %v628 = vsub.s32 %v625, %v627
      %v629 = vrot.slane %v615, %v628
      %v630 = vcombine.low %v622, %v629
      %v631 = vcombine.low %v347, %v356
      %v632 = vcombine.low %v364, %v363
      %v634 = vunpack.c.l.s4 1983009808
      %v635 = vunpack.c.0.s8 %v634
      %v636 = vlaneseq
      %v637 = vshrl.u32 %v636, 7
      %v638 = vsub.s32 %v635, %v637
      %v639 = vrot.slane %v631, %v638
      %v641 = vunpack.c.l.s4 1983009808
      %v642 = vunpack.c.0.s8 %v641
      %v643 = vlaneseq
      %v644 = vshrl.u32 %v643, 7
      %v645 = vsub.s32 %v642, %v644
      %v646 = vrot.slane %v632, %v645
      %v647 = vcombine.low %v639, %v646
      %v648 = vcombine.low %v372, %v380
      %v649 = vcombine.low %v379, %v388
      %v651 = vunpack.c.l.s4 1983009808
      %v652 = vunpack.c.0.s8 %v651
      %v653 = vlaneseq
      %v654 = vshrl.u32 %v653, 7
      %v655 = vsub.s32 %v652, %v654
      %v656 = vrot.slane %v648, %v655
      %v658 = vunpack.c.l.s4 1983009808
      %v659 = vunpack.c.0.s8 %v658
      %v660 = vlaneseq
      %v661 = vshrl.u32 %v660, 7
      %v662 = vsub.s32 %v659, %v661
      %v663 = vrot.slane %v649, %v662
      %v664 = vcombine.low %v656, %v663
      %v665 = vcombine.low %v396, %v395
      %v666 = vcombine.low %v404, %v412
      %v668 = vunpack.c.l.s4 1983009808
      %v669 = vunpack.c.0.s8 %v668
      %v670 = vlaneseq
      %v671 = vshrl.u32 %v670, 7
      %v672 = vsub.s32 %v669, %v671
      %v673 = vrot.slane %v665, %v672
      %v675 = vunpack.c.l.s4 1983009808
      %v676 = vunpack.c.0.s8 %v675
      %v677 = vlaneseq
      %v678 = vshrl.u32 %v677, 7
      %v679 = vsub.s32 %v676, %v678
      %v680 = vrot.slane %v666, %v679
      %v681 = vcombine.low %v673, %v680
      %v682 = vcombine.low %v411, %v420
      %v683 = vcombine.low %v428, %v427
      %v685 = vunpack.c.l.s4 1983009808
      %v686 = vunpack.c.0.s8 %v685
      %v687 = vlaneseq
      %v688 = vshrl.u32 %v687, 7
      %v689 = vsub.s32 %v686, %v688
      %v690 = vrot.slane %v682, %v689
      %v692 = vunpack.c.l.s4 1983009808
      %v693 = vunpack.c.0.s8 %v692
      %v694 = vlaneseq
      %v695 = vshrl.u32 %v694, 7
      %v696 = vsub.s32 %v693, %v695
      %v697 = vrot.slane %v683, %v696
      %v698 = vcombine.low %v690, %v697
      %v699 = vsel %vm440, %v613, 0
      %v701 = vsel %vm440, %v630, 0
      %v703 = vsel %vm440, %v647, 0
      %v705 = vsel %vm440, %v664, 0
      %v707 = vsel %vm440, %v681, 0
      %v709 = vsel %vm440, %v698, 0
      %711 = vmatprep.subr.mxu0 0.0
      %712 = vmatpush1.msra.mxu0 %v586
      %713 = vmatprep.subr.mxu0 0.0
      %714 = vmatpush1.msra.mxu0 %v587
      %715 = vmatprep.subr.mxu0 0.0
      %716 = vmatpush1.msra.mxu0 %v588
      %717 = vmatprep.subr.mxu0 0.0
      %718 = vmatpush1.msra.mxu0 %v589
      %719 = vmatprep.subr.mxu0 0.0
      %720 = vmatpush1.msra.mxu0 0.0
      %721 = vmatprep.subr.mxu0 0.0
      %722 = vmatpush1.msra.mxu0 0.0
      %723 = vmatprep.subr.mxu0 0.0
      %724 = vmatpush1.msra.mxu0 0.0
      %725 = vmatprep.subr.mxu0 0.0
      %726 = vmatpush1.msra.mxu0 0.0
      %727 = vmatprep.subr.mxu0 0.0
      %728 = vmatpush1.msra.mxu0 0.0
      %729 = vmatprep.subr.mxu0 0.0
      %730 = vmatpush1.msra.mxu0 0.0
      %731 = vmatprep.subr.mxu0 0.0
      %732 = vmatpush1.msra.mxu0 0.0
      %733 = vmatprep.subr.mxu0 0.0
      %734 = vmatpush1.msra.mxu0 0.0
      %735 = vmatprep.subr.mxu0 0.0
      %736 = vmatpush1.msra.mxu0 0.0
      %737 = vmatprep.subr.mxu0 0.0
      %738 = vmatpush1.msra.mxu0 0.0
      %739 = vmatprep.subr.mxu0 0.0
      %740 = vmatpush1.msra.mxu0 0.0
      %741 = vmatprep.subr.mxu0 0.0
      %742 = vmatpush1.msra.mxu0 0.0
      %743 = vmatprep.subr.mxu0 0.0
      %744 = vmatpush1.msra.mxu0 0.0
      %745 = vmatprep.subr.mxu0 0.0
      %746 = vmatpush1.msra.mxu0 0.0
      %747 = vmatprep.subr.mxu0 0.0
      %748 = vmatpush1.msra.mxu0 0.0
      %749 = vmatprep.subr.mxu0 0.0
      %750 = vmatpush1.msra.mxu0 0.0
      %751 = vmatprep.subr.mxu0 0.0
      %752 = vmatpush1.msra.mxu0 0.0
      %753 = vmatprep.subr.mxu0 0.0
      %754 = vmatpush1.msra.mxu0 0.0
      %755 = vmatprep.subr.mxu0 0.0
      %756 = vmatpush1.msra.mxu0 0.0
      %757 = vmatprep.subr.mxu0 0.0
      %758 = vmatpush1.msra.mxu0 0.0
      %759 = vmatprep.subr.mxu0 0.0
      %760 = vmatpush1.msra.mxu0 0.0
      %761 = vmatprep.subr.mxu0 0.0
      %762 = vmatpush1.msra.mxu0 0.0
      %763 = vmatprep.subr.mxu0 0.0
      %764 = vmatpush1.msra.mxu0 0.0
      %765 = vmatprep.subr.mxu0 0.0
      %766 = vmatpush1.msra.mxu0 0.0
      %767 = vmatprep.subr.mxu0 0.0
      %768 = vmatpush1.msra.mxu0 0.0
      %769 = vmatprep.subr.mxu0 0.0
      %770 = vmatpush1.msra.mxu0 0.0
      %771 = vmatprep.subr.mxu0 0.0
      %772 = vmatpush1.msra.mxu0 0.0
      %773 = vmatprep.subr.mxu0 0.0
      %774 = vmatpush1.msra.mxu0 0.0
      %775 = vmatprep.mubr.f32.mxu0 0.0
      %776 = vmatmul.mubr.f32.gmra.mrb[0].mxu0 %v699
      %v777 = vpop.f32.mrb[0].mxu0
      %v778 = vadd.f32 %v595, %v777
      %v779 = vpop.f32.mrb[0].mxu0
      %780 = vmatprep.mubr.f32.mxu0 0.0
      %781 = vmatmul.mubr.f32.gmra.mrb[0].mxu0 %v701
      %v782 = vpop.f32.mrb[0].mxu0
      %v783 = vadd.f32 %v595, %v782
      %v784 = vpop.f32.mrb[0].mxu0
      %785 = vmatprep.mubr.f32.mxu0 0.0
      %786 = vmatmul.mubr.f32.gmra.mrb[0].mxu0 %v703
      %v787 = vpop.f32.mrb[0].mxu0
      %v788 = vadd.f32 %v595, %v787
      %v789 = vpop.f32.mrb[0].mxu0
      %790 = vmatprep.mubr.f32.mxu0 0.0
      %791 = vmatmul.mubr.f32.gmra.mrb[0].mxu0 %v705
      %v792 = vpop.f32.mrb[0].mxu0
      %v793 = vadd.f32 %v595, %v792
      %v794 = vpop.f32.mrb[0].mxu0
      %795 = vmatprep.mubr.f32.mxu0 0.0
      %796 = vmatmul.mubr.f32.gmra.mrb[0].mxu0 %v707
      %v797 = vpop.f32.mrb[0].mxu0
      %v798 = vadd.f32 %v595, %v797
      %v799 = vpop.f32.mrb[0].mxu0
      %800 = vmatprep.mubr.f32.mxu0 0.0
      %801 = vmatmul.mubr.f32.gmra.mrb[0].mxu0 %v709
      %v802 = vpop.f32.mrb[0].mxu0
      %v803 = vadd.f32 %v595, %v802
      %v804 = vpop.f32.mrb[0].mxu0
      %805 = vdwg.mxu0
      %v806 = vmul.f32 %v778, 0.01
      %v807 = vmul.f32 %v783, 0.01
      %v808 = vmul.f32 %v788, 0.01
      %v809 = vmul.f32 %v793, 0.01
      %v810 = vmul.f32 %v798, 0.01
      %v811 = vmul.f32 %v803, 0.01
      %v812 = vmax.f32 %v778, %v806
      %v813 = vmax.f32 %v783, %v807
      %v814 = vmax.f32 %v788, %v808
      %v815 = vmax.f32 %v793, %v809
      %v816 = vmax.f32 %v798, %v810
      %v817 = vmax.f32 %v803, %v811
      %v824 = vcombine.high %v812, %v812
      %v826 = vunpack.c.l.s4 1983009808
      %v827 = vunpack.c.0.s8 %v826
      %v828 = vlaneseq
      %v829 = vshrl.u32 %v828, 7
      %v830 = vsub.s32 %v827, %v829
      %v831 = vrot.slane %v812, %v830
      %v833 = vunpack.c.l.s4 1983009808
      %v834 = vunpack.c.0.s8 %v833
      %v835 = vlaneseq
      %v836 = vshrl.u32 %v835, 7
      %v837 = vsub.s32 %v834, %v836
      %v838 = vrot.slane %v824, %v837
      %v839 = vcombine.high %v831, %v831
      %v840 = vcombine.high %v838, %v838
      %v841 = vcombine.high %v813, %v813
      %v843 = vunpack.c.l.s4 1983009808
      %v844 = vunpack.c.0.s8 %v843
      %v845 = vlaneseq
      %v846 = vshrl.u32 %v845, 7
      %v847 = vsub.s32 %v844, %v846
      %v848 = vrot.slane %v813, %v847
      %v850 = vunpack.c.l.s4 1983009808
      %v851 = vunpack.c.0.s8 %v850
      %v852 = vlaneseq
      %v853 = vshrl.u32 %v852, 7
      %v854 = vsub.s32 %v851, %v853
      %v855 = vrot.slane %v841, %v854
      %v856 = vcombine.high %v848, %v848
      %v857 = vcombine.high %v855, %v855
      %v858 = vcombine.high %v814, %v814
      %v860 = vunpack.c.l.s4 1983009808
      %v861 = vunpack.c.0.s8 %v860
      %v862 = vlaneseq
      %v863 = vshrl.u32 %v862, 7
      %v864 = vsub.s32 %v861, %v863
      %v865 = vrot.slane %v814, %v864
      %v867 = vunpack.c.l.s4 1983009808
      %v868 = vunpack.c.0.s8 %v867
      %v869 = vlaneseq
      %v870 = vshrl.u32 %v869, 7
      %v871 = vsub.s32 %v868, %v870
      %v872 = vrot.slane %v858, %v871
      %v873 = vcombine.high %v865, %v865
      %v874 = vcombine.high %v872, %v872
      %v875 = vcombine.high %v815, %v815
      %v877 = vunpack.c.l.s4 1983009808
      %v878 = vunpack.c.0.s8 %v877
      %v879 = vlaneseq
      %v880 = vshrl.u32 %v879, 7
      %v881 = vsub.s32 %v878, %v880
      %v882 = vrot.slane %v815, %v881
      %v884 = vunpack.c.l.s4 1983009808
      %v885 = vunpack.c.0.s8 %v884
      %v886 = vlaneseq
      %v887 = vshrl.u32 %v886, 7
      %v888 = vsub.s32 %v885, %v887
      %v889 = vrot.slane %v875, %v888
      %v890 = vcombine.high %v882, %v882
      %v891 = vcombine.high %v889, %v889
      %v892 = vcombine.high %v816, %v816
      %v894 = vunpack.c.l.s4 1983009808
      %v895 = vunpack.c.0.s8 %v894
      %v896 = vlaneseq
      %v897 = vshrl.u32 %v896, 7
      %v898 = vsub.s32 %v895, %v897
      %v899 = vrot.slane %v816, %v898
      %v901 = vunpack.c.l.s4 1983009808
      %v902 = vunpack.c.0.s8 %v901
      %v903 = vlaneseq
      %v904 = vshrl.u32 %v903, 7
      %v905 = vsub.s32 %v902, %v904
      %v906 = vrot.slane %v892, %v905
      %v907 = vcombine.high %v899, %v899
      %v908 = vcombine.high %v906, %v906
      %v909 = vcombine.high %v817, %v817
      %v911 = vunpack.c.l.s4 1983009808
      %v912 = vunpack.c.0.s8 %v911
      %v913 = vlaneseq
      %v914 = vshrl.u32 %v913, 7
      %v915 = vsub.s32 %v912, %v914
      %v916 = vrot.slane %v817, %v915
      %v918 = vunpack.c.l.s4 1983009808
      %v919 = vunpack.c.0.s8 %v918
      %v920 = vlaneseq
      %v921 = vshrl.u32 %v920, 7
      %v922 = vsub.s32 %v919, %v921
      %v923 = vrot.slane %v909, %v922
      %v924 = vcombine.high %v916, %v916
      %v925 = vcombine.high %v923, %v923
      %v926 = vcombine.low %v831, %v839
      %v928 = vunpack.c.l.s4 1983009808
      %v929 = vunpack.c.0.s8 %v928
      %v930 = vlaneseq
      %v931 = vshrl.u32 %v930, 7
      %v932 = vsub.s32 %v929, %v931
      %v933 = vrot.slane %v926, %v932
      %v935 = vunpack.c.l.s4 1983009808
      %v936 = vunpack.c.0.s8 %v935
      %v937 = vlaneseq
      %v938 = vshrl.u32 %v937, 7
      %v939 = vsub.s32 %v936, %v938
      %v940 = vrot.slane %v838, %v939
      %v941 = vcombine.low %v933, %v940
      %v943 = vsel %vm440, %v578, 0
      %v945 = vsel %vm440, %v941, 0
      %947 = vmatprep.subr.mxu0 0.0
      %948 = vmatpush1.xpose.msra.mxu0 %v945
      %949 = vmatprep.subr.mxu0 0.0
      %950 = vmatpush1.xpose.msra.mxu0 0.0
      %951 = vmatprep.subr.mxu0 0.0
      %952 = vmatpush1.xpose.msra.mxu0 0.0
      %953 = vmatprep.subr.mxu0 0.0
      %954 = vmatpush1.xpose.msra.mxu0 0.0
      %955 = vmatprep.subr.mxu0 0.0
      %956 = vmatpush1.xpose.msra.mxu0 0.0
      %957 = vmatprep.subr.mxu0 0.0
      %958 = vmatpush1.xpose.msra.mxu0 0.0
      %959 = vmatprep.subr.mxu0 0.0
      %960 = vmatpush1.xpose.msra.mxu0 0.0
      %961 = vmatprep.subr.mxu0 0.0
      %962 = vmatpush1.xpose.msra.mxu0 0.0
      %963 = vmatprep.subr.mxu0 0.0
      %964 = vmatpush1.xpose.msra.mxu0 0.0
      %965 = vmatprep.subr.mxu0 0.0
      %966 = vmatpush1.xpose.msra.mxu0 0.0
      %967 = vmatprep.subr.mxu0 0.0
      %968 = vmatpush1.xpose.msra.mxu0 0.0
      %969 = vmatprep.subr.mxu0 0.0
      %970 = vmatpush1.xpose.msra.mxu0 0.0
      %971 = vmatprep.subr.mxu0 0.0
      %972 = vmatpush1.xpose.msra.mxu0 0.0
      %973 = vmatprep.subr.mxu0 0.0
      %974 = vmatpush1.xpose.msra.mxu0 0.0
      %975 = vmatprep.subr.mxu0 0.0
      %976 = vmatpush1.xpose.msra.mxu0 0.0
      %977 = vmatprep.subr.mxu0 0.0
      %978 = vmatpush1.xpose.msra.mxu0 0.0
      %979 = vmatprep.subr.mxu0 0.0
      %980 = vmatpush1.xpose.msra.mxu0 0.0
      %981 = vmatprep.subr.mxu0 0.0
      %982 = vmatpush1.xpose.msra.mxu0 0.0
      %983 = vmatprep.subr.mxu0 0.0
      %984 = vmatpush1.xpose.msra.mxu0 0.0
      %985 = vmatprep.subr.mxu0 0.0
      %986 = vmatpush1.xpose.msra.mxu0 0.0
      %987 = vmatprep.subr.mxu0 0.0
      %988 = vmatpush1.xpose.msra.mxu0 0.0
      %989 = vmatprep.subr.mxu0 0.0
      %990 = vmatpush1.xpose.msra.mxu0 0.0
      %991 = vmatprep.subr.mxu0 0.0
      %992 = vmatpush1.xpose.msra.mxu0 0.0
      %993 = vmatprep.subr.mxu0 0.0
      %994 = vmatpush1.xpose.msra.mxu0 0.0
      %995 = vmatprep.subr.mxu0 0.0
      %996 = vmatpush1.xpose.msra.mxu0 0.0
      %997 = vmatprep.subr.mxu0 0.0
      %998 = vmatpush1.xpose.msra.mxu0 0.0
      %999 = vmatprep.subr.mxu0 0.0
      %1000 = vmatpush1.xpose.msra.mxu0 0.0
      %1001 = vmatprep.subr.mxu0 0.0
      %1002 = vmatpush1.xpose.msra.mxu0 0.0
      %1003 = vmatprep.subr.mxu0 0.0
      %1004 = vmatpush1.xpose.msra.mxu0 0.0
      %1005 = vmatprep.subr.mxu0 0.0
      %1006 = vmatpush1.xpose.msra.mxu0 0.0
      %1007 = vmatprep.subr.mxu0 0.0
      %1008 = vmatpush1.xpose.msra.mxu0 0.0
      %1009 = vmatprep.subr.mxu0 0.0
      %1010 = vmatpush1.xpose.msra.mxu0 0.0
      %1011 = vmatprep.mubr.f32.mxu0 0.0
      %1012 = vmatmul.mubr.f32.gmra.mrb[0].mxu0 %v943
      %v1013 = vpop.f32.mrb[0].mxu0
      %v1014 = vadd.f32 0.0, %v1013
      %v1015 = vpop.f32.mrb[0].mxu0
      %1016 = vdwg.mxu0
      %v1017 = vcombine.low %v840, %v848
      %v1019 = vunpack.c.l.s4 1983009808
      %v1020 = vunpack.c.0.s8 %v1019
      %v1021 = vlaneseq
      %v1022 = vshrl.u32 %v1021, 7
      %v1023 = vsub.s32 %v1020, %v1022
      %v1024 = vrot.slane %v1017, %v1023
      %v1026 = vunpack.c.l.s4 1983009808
      %v1027 = vunpack.c.0.s8 %v1026
      %v1028 = vlaneseq
      %v1029 = vshrl.u32 %v1028, 7
      %v1030 = vsub.s32 %v1027, %v1029
      %v1031 = vrot.slane %v856, %v1030
      %v1032 = vcombine.low %v1024, %v1031
      %v1034 = vsel %vm440, %v579, 0
      %v1036 = vsel %vm440, %v1032, 0
      %1038 = vmatprep.subr.mxu0 0.0
      %1039 = vmatpush1.xpose.msra.mxu0 %v1036
      %1040 = vmatprep.subr.mxu0 0.0
      %1041 = vmatpush1.xpose.msra.mxu0 0.0
      %1042 = vmatprep.subr.mxu0 0.0
      %1043 = vmatpush1.xpose.msra.mxu0 0.0
      %1044 = vmatprep.subr.mxu0 0.0
      %1045 = vmatpush1.xpose.msra.mxu0 0.0
      %1046 = vmatprep.subr.mxu0 0.0
      %1047 = vmatpush1.xpose.msra.mxu0 0.0
      %1048 = vmatprep.subr.mxu0 0.0
      %1049 = vmatpush1.xpose.msra.mxu0 0.0
      %1050 = vmatprep.subr.mxu0 0.0
      %1051 = vmatpush1.xpose.msra.mxu0 0.0
      %1052 = vmatprep.subr.mxu0 0.0
      %1053 = vmatpush1.xpose.msra.mxu0 0.0
      %1054 = vmatprep.subr.mxu0 0.0
      %1055 = vmatpush1.xpose.msra.mxu0 0.0
      %1056 = vmatprep.subr.mxu0 0.0
      %1057 = vmatpush1.xpose.msra.mxu0 0.0
      %1058 = vmatprep.subr.mxu0 0.0
      %1059 = vmatpush1.xpose.msra.mxu0 0.0
      %1060 = vmatprep.subr.mxu0 0.0
      %1061 = vmatpush1.xpose.msra.mxu0 0.0
      %1062 = vmatprep.subr.mxu0 0.0
      %1063 = vmatpush1.xpose.msra.mxu0 0.0
      %1064 = vmatprep.subr.mxu0 0.0
      %1065 = vmatpush1.xpose.msra.mxu0 0.0
      %1066 = vmatprep.subr.mxu0 0.0
      %1067 = vmatpush1.xpose.msra.mxu0 0.0
      %1068 = vmatprep.subr.mxu0 0.0
      %1069 = vmatpush1.xpose.msra.mxu0 0.0
      %1070 = vmatprep.subr.mxu0 0.0
      %1071 = vmatpush1.xpose.msra.mxu0 0.0
      %1072 = vmatprep.subr.mxu0 0.0
      %1073 = vmatpush1.xpose.msra.mxu0 0.0
      %1074 = vmatprep.subr.mxu0 0.0
      %1075 = vmatpush1.xpose.msra.mxu0 0.0
      %1076 = vmatprep.subr.mxu0 0.0
      %1077 = vmatpush1.xpose.msra.mxu0 0.0
      %1078 = vmatprep.subr.mxu0 0.0
      %1079 = vmatpush1.xpose.msra.mxu0 0.0
      %1080 = vmatprep.subr.mxu0 0.0
      %1081 = vmatpush1.xpose.msra.mxu0 0.0
      %1082 = vmatprep.subr.mxu0 0.0
      %1083 = vmatpush1.xpose.msra.mxu0 0.0
      %1084 = vmatprep.subr.mxu0 0.0
      %1085 = vmatpush1.xpose.msra.mxu0 0.0
      %1086 = vmatprep.subr.mxu0 0.0
      %1087 = vmatpush1.xpose.msra.mxu0 0.0
      %1088 = vmatprep.subr.mxu0 0.0
      %1089 = vmatpush1.xpose.msra.mxu0 0.0
      %1090 = vmatprep.subr.mxu0 0.0
      %1091 = vmatpush1.xpose.msra.mxu0 0.0
      %1092 = vmatprep.subr.mxu0 0.0
      %1093 = vmatpush1.xpose.msra.mxu0 0.0
      %1094 = vmatprep.subr.mxu0 0.0
      %1095 = vmatpush1.xpose.msra.mxu0 0.0
      %1096 = vmatprep.subr.mxu0 0.0
      %1097 = vmatpush1.xpose.msra.mxu0 0.0
      %1098 = vmatprep.subr.mxu0 0.0
      %1099 = vmatpush1.xpose.msra.mxu0 0.0
      %1100 = vmatprep.subr.mxu0 0.0
      %1101 = vmatpush1.xpose.msra.mxu0 0.0
      %1102 = vmatprep.mubr.f32.mxu0 0.0
      %1103 = vmatmul.mubr.f32.gmra.mrb[0].mxu0 %v1034
      %v1104 = vpop.f32.mrb[0].mxu0
      %v1105 = vadd.f32 0.0, %v1104
      %v1106 = vpop.f32.mrb[0].mxu0
      %1107 = vdwg.mxu0
      %v1108 = vcombine.low %v855, %v857
      %v1110 = vunpack.c.l.s4 1983009808
      %v1111 = vunpack.c.0.s8 %v1110
      %v1112 = vlaneseq
      %v1113 = vshrl.u32 %v1112, 7
      %v1114 = vsub.s32 %v1111, %v1113
      %v1115 = vrot.slane %v1108, %v1114
      %v1117 = vunpack.c.l.s4 1983009808
      %v1118 = vunpack.c.0.s8 %v1117
      %v1119 = vlaneseq
      %v1120 = vshrl.u32 %v1119, 7
      %v1121 = vsub.s32 %v1118, %v1120
      %v1122 = vrot.slane %v865, %v1121
      %v1123 = vcombine.low %v1115, %v1122
      %v1125 = vsel %vm440, %v580, 0
      %v1127 = vsel %vm440, %v1123, 0
      %1129 = vmatprep.subr.mxu0 0.0
      %1130 = vmatpush1.xpose.msra.mxu0 %v1127
      %1131 = vmatprep.subr.mxu0 0.0
      %1132 = vmatpush1.xpose.msra.mxu0 0.0
      %1133 = vmatprep.subr.mxu0 0.0
      %1134 = vmatpush1.xpose.msra.mxu0 0.0
      %1135 = vmatprep.subr.mxu0 0.0
      %1136 = vmatpush1.xpose.msra.mxu0 0.0
      %1137 = vmatprep.subr.mxu0 0.0
      %1138 = vmatpush1.xpose.msra.mxu0 0.0
      %1139 = vmatprep.subr.mxu0 0.0
      %1140 = vmatpush1.xpose.msra.mxu0 0.0
      %1141 = vmatprep.subr.mxu0 0.0
      %1142 = vmatpush1.xpose.msra.mxu0 0.0
      %1143 = vmatprep.subr.mxu0 0.0
      %1144 = vmatpush1.xpose.msra.mxu0 0.0
      %1145 = vmatprep.subr.mxu0 0.0
      %1146 = vmatpush1.xpose.msra.mxu0 0.0
      %1147 = vmatprep.subr.mxu0 0.0
      %1148 = vmatpush1.xpose.msra.mxu0 0.0
      %1149 = vmatprep.subr.mxu0 0.0
      %1150 = vmatpush1.xpose.msra.mxu0 0.0
      %1151 = vmatprep.subr.mxu0 0.0
      %1152 = vmatpush1.xpose.msra.mxu0 0.0
      %1153 = vmatprep.subr.mxu0 0.0
      %1154 = vmatpush1.xpose.msra.mxu0 0.0
      %1155 = vmatprep.subr.mxu0 0.0
      %1156 = vmatpush1.xpose.msra.mxu0 0.0
      %1157 = vmatprep.subr.mxu0 0.0
      %1158 = vmatpush1.xpose.msra.mxu0 0.0
      %1159 = vmatprep.subr.mxu0 0.0
      %1160 = vmatpush1.xpose.msra.mxu0 0.0
      %1161 = vmatprep.subr.mxu0 0.0
      %1162 = vmatpush1.xpose.msra.mxu0 0.0
      %1163 = vmatprep.subr.mxu0 0.0
      %1164 = vmatpush1.xpose.msra.mxu0 0.0
      %1165 = vmatprep.subr.mxu0 0.0
      %1166 = vmatpush1.xpose.msra.mxu0 0.0
      %1167 = vmatprep.subr.mxu0 0.0
      %1168 = vmatpush1.xpose.msra.mxu0 0.0
      %1169 = vmatprep.subr.mxu0 0.0
      %1170 = vmatpush1.xpose.msra.mxu0 0.0
      %1171 = vmatprep.subr.mxu0 0.0
      %1172 = vmatpush1.xpose.msra.mxu0 0.0
      %1173 = vmatprep.subr.mxu0 0.0
      %1174 = vmatpush1.xpose.msra.mxu0 0.0
      %1175 = vmatprep.subr.mxu0 0.0
      %1176 = vmatpush1.xpose.msra.mxu0 0.0
      %1177 = vmatprep.subr.mxu0 0.0
      %1178 = vmatpush1.xpose.msra.mxu0 0.0
      %1179 = vmatprep.subr.mxu0 0.0
      %1180 = vmatpush1.xpose.msra.mxu0 0.0
      %1181 = vmatprep.subr.mxu0 0.0
      %1182 = vmatpush1.xpose.msra.mxu0 0.0
      %1183 = vmatprep.subr.mxu0 0.0
      %1184 = vmatpush1.xpose.msra.mxu0 0.0
      %1185 = vmatprep.subr.mxu0 0.0
      %1186 = vmatpush1.xpose.msra.mxu0 0.0
      %1187 = vmatprep.subr.mxu0 0.0
      %1188 = vmatpush1.xpose.msra.mxu0 0.0
      %1189 = vmatprep.subr.mxu0 0.0
      %1190 = vmatpush1.xpose.msra.mxu0 0.0
      %1191 = vmatprep.subr.mxu0 0.0
      %1192 = vmatpush1.xpose.msra.mxu0 0.0
      %1193 = vmatprep.mubr.f32.mxu0 0.0
      %1194 = vmatmul.mubr.f32.gmra.mrb[0].mxu0 %v1125
      %v1195 = vpop.f32.mrb[0].mxu0
      %v1196 = vadd.f32 0.0, %v1195
      %v1197 = vpop.f32.mrb[0].mxu0
      %1198 = vdwg.mxu0
      %v1199 = vcombine.low %v873, %v872
      %v1201 = vunpack.c.l.s4 1983009808
      %v1202 = vunpack.c.0.s8 %v1201
      %v1203 = vlaneseq
      %v1204 = vshrl.u32 %v1203, 7
      %v1205 = vsub.s32 %v1202, %v1204
      %v1206 = vrot.slane %v1199, %v1205
      %v1208 = vunpack.c.l.s4 1983009808
      %v1209 = vunpack.c.0.s8 %v1208
      %v1210 = vlaneseq
      %v1211 = vshrl.u32 %v1210, 7
      %v1212 = vsub.s32 %v1209, %v1211
      %v1213 = vrot.slane %v874, %v1212
      %v1214 = vcombine.low %v1206, %v1213
      %v1216 = vsel %vm440, %v581, 0
      %v1218 = vsel %vm440, %v1214, 0
      %1220 = vmatprep.subr.mxu0 0.0
      %1221 = vmatpush1.xpose.msra.mxu0 %v1218
      %1222 = vmatprep.subr.mxu0 0.0
      %1223 = vmatpush1.xpose.msra.mxu0 0.0
      %1224 = vmatprep.subr.mxu0 0.0
      %1225 = vmatpush1.xpose.msra.mxu0 0.0
      %1226 = vmatprep.subr.mxu0 0.0
      %1227 = vmatpush1.xpose.msra.mxu0 0.0
      %1228 = vmatprep.subr.mxu0 0.0
      %1229 = vmatpush1.xpose.msra.mxu0 0.0
      %1230 = vmatprep.subr.mxu0 0.0
      %1231 = vmatpush1.xpose.msra.mxu0 0.0
      %1232 = vmatprep.subr.mxu0 0.0
      %1233 = vmatpush1.xpose.msra.mxu0 0.0
      %1234 = vmatprep.subr.mxu0 0.0
      %1235 = vmatpush1.xpose.msra.mxu0 0.0
      %1236 = vmatprep.subr.mxu0 0.0
      %1237 = vmatpush1.xpose.msra.mxu0 0.0
      %1238 = vmatprep.subr.mxu0 0.0
      %1239 = vmatpush1.xpose.msra.mxu0 0.0
      %1240 = vmatprep.subr.mxu0 0.0
      %1241 = vmatpush1.xpose.msra.mxu0 0.0
      %1242 = vmatprep.subr.mxu0 0.0
      %1243 = vmatpush1.xpose.msra.mxu0 0.0
      %1244 = vmatprep.subr.mxu0 0.0
      %1245 = vmatpush1.xpose.msra.mxu0 0.0
      %1246 = vmatprep.subr.mxu0 0.0
      %1247 = vmatpush1.xpose.msra.mxu0 0.0
      %1248 = vmatprep.subr.mxu0 0.0
      %1249 = vmatpush1.xpose.msra.mxu0 0.0
      %1250 = vmatprep.subr.mxu0 0.0
      %1251 = vmatpush1.xpose.msra.mxu0 0.0
      %1252 = vmatprep.subr.mxu0 0.0
      %1253 = vmatpush1.xpose.msra.mxu0 0.0
      %1254 = vmatprep.subr.mxu0 0.0
      %1255 = vmatpush1.xpose.msra.mxu0 0.0
      %1256 = vmatprep.subr.mxu0 0.0
      %1257 = vmatpush1.xpose.msra.mxu0 0.0
      %1258 = vmatprep.subr.mxu0 0.0
      %1259 = vmatpush1.xpose.msra.mxu0 0.0
      %1260 = vmatprep.subr.mxu0 0.0
      %1261 = vmatpush1.xpose.msra.mxu0 0.0
      %1262 = vmatprep.subr.mxu0 0.0
      %1263 = vmatpush1.xpose.msra.mxu0 0.0
      %1264 = vmatprep.subr.mxu0 0.0
      %1265 = vmatpush1.xpose.msra.mxu0 0.0
      %1266 = vmatprep.subr.mxu0 0.0
      %1267 = vmatpush1.xpose.msra.mxu0 0.0
      %1268 = vmatprep.subr.mxu0 0.0
      %1269 = vmatpush1.xpose.msra.mxu0 0.0
      %1270 = vmatprep.subr.mxu0 0.0
      %1271 = vmatpush1.xpose.msra.mxu0 0.0
      %1272 = vmatprep.subr.mxu0 0.0
      %1273 = vmatpush1.xpose.msra.mxu0 0.0
      %1274 = vmatprep.subr.mxu0 0.0
      %1275 = vmatpush1.xpose.msra.mxu0 0.0
      %1276 = vmatprep.subr.mxu0 0.0
      %1277 = vmatpush1.xpose.msra.mxu0 0.0
      %1278 = vmatprep.subr.mxu0 0.0
      %1279 = vmatpush1.xpose.msra.mxu0 0.0
      %1280 = vmatprep.subr.mxu0 0.0
      %1281 = vmatpush1.xpose.msra.mxu0 0.0
      %1282 = vmatprep.subr.mxu0 0.0
      %1283 = vmatpush1.xpose.msra.mxu0 0.0
      %1284 = vmatprep.mubr.f32.mxu0 0.0
      %1285 = vmatmul.mubr.f32.gmra.mrb[0].mxu0 %v1216
      %v1286 = vpop.f32.mrb[0].mxu0
      %v1287 = vadd.f32 0.0, %v1286
      %v1288 = vpop.f32.mrb[0].mxu0
      %1289 = vdwg.mxu0
      %v1290 = vcombine.low %v882, %v890
      %v1292 = vunpack.c.l.s4 1983009808
      %v1293 = vunpack.c.0.s8 %v1292
      %v1294 = vlaneseq
      %v1295 = vshrl.u32 %v1294, 7
      %v1296 = vsub.s32 %v1293, %v1295
      %v1297 = vrot.slane %v1290, %v1296
      %v1299 = vunpack.c.l.s4 1983009808
      %v1300 = vunpack.c.0.s8 %v1299
      %v1301 = vlaneseq
      %v1302 = vshrl.u32 %v1301, 7
      %v1303 = vsub.s32 %v1300, %v1302
      %v1304 = vrot.slane %v889, %v1303
      %v1305 = vcombine.low %v1297, %v1304
      %v1307 = vsel %vm440, %v582, 0
      %v1309 = vsel %vm440, %v1305, 0
      %1311 = vmatprep.subr.mxu0 0.0
      %1312 = vmatpush1.xpose.msra.mxu0 %v1309
      %1313 = vmatprep.subr.mxu0 0.0
      %1314 = vmatpush1.xpose.msra.mxu0 0.0
      %1315 = vmatprep.subr.mxu0 0.0
      %1316 = vmatpush1.xpose.msra.mxu0 0.0
      %1317 = vmatprep.subr.mxu0 0.0
      %1318 = vmatpush1.xpose.msra.mxu0 0.0
      %1319 = vmatprep.subr.mxu0 0.0
      %1320 = vmatpush1.xpose.msra.mxu0 0.0
      %1321 = vmatprep.subr.mxu0 0.0
      %1322 = vmatpush1.xpose.msra.mxu0 0.0
      %1323 = vmatprep.subr.mxu0 0.0
      %1324 = vmatpush1.xpose.msra.mxu0 0.0
      %1325 = vmatprep.subr.mxu0 0.0
      %1326 = vmatpush1.xpose.msra.mxu0 0.0
      %1327 = vmatprep.subr.mxu0 0.0
      %1328 = vmatpush1.xpose.msra.mxu0 0.0
      %1329 = vmatprep.subr.mxu0 0.0
      %1330 = vmatpush1.xpose.msra.mxu0 0.0
      %1331 = vmatprep.subr.mxu0 0.0
      %1332 = vmatpush1.xpose.msra.mxu0 0.0
      %1333 = vmatprep.subr.mxu0 0.0
      %1334 = vmatpush1.xpose.msra.mxu0 0.0
      %1335 = vmatprep.subr.mxu0 0.0
      %1336 = vmatpush1.xpose.msra.mxu0 0.0
      %1337 = vmatprep.subr.mxu0 0.0
      %1338 = vmatpush1.xpose.msra.mxu0 0.0
      %1339 = vmatprep.subr.mxu0 0.0
      %1340 = vmatpush1.xpose.msra.mxu0 0.0
      %1341 = vmatprep.subr.mxu0 0.0
      %1342 = vmatpush1.xpose.msra.mxu0 0.0
      %1343 = vmatprep.subr.mxu0 0.0
      %1344 = vmatpush1.xpose.msra.mxu0 0.0
      %1345 = vmatprep.subr.mxu0 0.0
      %1346 = vmatpush1.xpose.msra.mxu0 0.0
      %1347 = vmatprep.subr.mxu0 0.0
      %1348 = vmatpush1.xpose.msra.mxu0 0.0
      %1349 = vmatprep.subr.mxu0 0.0
      %1350 = vmatpush1.xpose.msra.mxu0 0.0
      %1351 = vmatprep.subr.mxu0 0.0
      %1352 = vmatpush1.xpose.msra.mxu0 0.0
      %1353 = vmatprep.subr.mxu0 0.0
      %1354 = vmatpush1.xpose.msra.mxu0 0.0
      %1355 = vmatprep.subr.mxu0 0.0
      %1356 = vmatpush1.xpose.msra.mxu0 0.0
      %1357 = vmatprep.subr.mxu0 0.0
      %1358 = vmatpush1.xpose.msra.mxu0 0.0
      %1359 = vmatprep.subr.mxu0 0.0
      %1360 = vmatpush1.xpose.msra.mxu0 0.0
      %1361 = vmatprep.subr.mxu0 0.0
      %1362 = vmatpush1.xpose.msra.mxu0 0.0
      %1363 = vmatprep.subr.mxu0 0.0
      %1364 = vmatpush1.xpose.msra.mxu0 0.0
      %1365 = vmatprep.subr.mxu0 0.0
      %1366 = vmatpush1.xpose.msra.mxu0 0.0
      %1367 = vmatprep.subr.mxu0 0.0
      %1368 = vmatpush1.xpose.msra.mxu0 0.0
      %1369 = vmatprep.subr.mxu0 0.0
      %1370 = vmatpush1.xpose.msra.mxu0 0.0
      %1371 = vmatprep.subr.mxu0 0.0
      %1372 = vmatpush1.xpose.msra.mxu0 0.0
      %1373 = vmatprep.subr.mxu0 0.0
      %1374 = vmatpush1.xpose.msra.mxu0 0.0
      %1375 = vmatprep.mubr.f32.mxu0 0.0
      %1376 = vmatmul.mubr.f32.gmra.mrb[0].mxu0 %v1307
      %v1377 = vpop.f32.mrb[0].mxu0
      %v1378 = vadd.f32 0.0, %v1377
      %v1379 = vpop.f32.mrb[0].mxu0
      %1380 = vdwg.mxu0
      %v1381 = vcombine.low %v891, %v899
      %v1383 = vunpack.c.l.s4 1983009808
      %v1384 = vunpack.c.0.s8 %v1383
      %v1385 = vlaneseq
      %v1386 = vshrl.u32 %v1385, 7
      %v1387 = vsub.s32 %v1384, %v1386
      %v1388 = vrot.slane %v1381, %v1387
      %v1390 = vunpack.c.l.s4 1983009808
      %v1391 = vunpack.c.0.s8 %v1390
      %v1392 = vlaneseq
      %v1393 = vshrl.u32 %v1392, 7
      %v1394 = vsub.s32 %v1391, %v1393
      %v1395 = vrot.slane %v907, %v1394
      %v1396 = vcombine.low %v1388, %v1395
      %v1398 = vsel %vm440, %v583, 0
      %v1400 = vsel %vm440, %v1396, 0
      %1402 = vmatprep.subr.mxu0 0.0
      %1403 = vmatpush1.xpose.msra.mxu0 %v1400
      %1404 = vmatprep.subr.mxu0 0.0
      %1405 = vmatpush1.xpose.msra.mxu0 0.0
      %1406 = vmatprep.subr.mxu0 0.0
      %1407 = vmatpush1.xpose.msra.mxu0 0.0
      %1408 = vmatprep.subr.mxu0 0.0
      %1409 = vmatpush1.xpose.msra.mxu0 0.0
      %1410 = vmatprep.subr.mxu0 0.0
      %1411 = vmatpush1.xpose.msra.mxu0 0.0
      %1412 = vmatprep.subr.mxu0 0.0
      %1413 = vmatpush1.xpose.msra.mxu0 0.0
      %1414 = vmatprep.subr.mxu0 0.0
      %1415 = vmatpush1.xpose.msra.mxu0 0.0
      %1416 = vmatprep.subr.mxu0 0.0
      %1417 = vmatpush1.xpose.msra.mxu0 0.0
      %1418 = vmatprep.subr.mxu0 0.0
      %1419 = vmatpush1.xpose.msra.mxu0 0.0
      %1420 = vmatprep.subr.mxu0 0.0
      %1421 = vmatpush1.xpose.msra.mxu0 0.0
      %1422 = vmatprep.subr.mxu0 0.0
      %1423 = vmatpush1.xpose.msra.mxu0 0.0
      %1424 = vmatprep.subr.mxu0 0.0
      %1425 = vmatpush1.xpose.msra.mxu0 0.0
      %1426 = vmatprep.subr.mxu0 0.0
      %1427 = vmatpush1.xpose.msra.mxu0 0.0
      %1428 = vmatprep.subr.mxu0 0.0
      %1429 = vmatpush1.xpose.msra.mxu0 0.0
      %1430 = vmatprep.subr.mxu0 0.0
      %1431 = vmatpush1.xpose.msra.mxu0 0.0
      %1432 = vmatprep.subr.mxu0 0.0
      %1433 = vmatpush1.xpose.msra.mxu0 0.0
      %1434 = vmatprep.subr.mxu0 0.0
      %1435 = vmatpush1.xpose.msra.mxu0 0.0
      %1436 = vmatprep.subr.mxu0 0.0
      %1437 = vmatpush1.xpose.msra.mxu0 0.0
      %1438 = vmatprep.subr.mxu0 0.0
      %1439 = vmatpush1.xpose.msra.mxu0 0.0
      %1440 = vmatprep.subr.mxu0 0.0
      %1441 = vmatpush1.xpose.msra.mxu0 0.0
      %1442 = vmatprep.subr.mxu0 0.0
      %1443 = vmatpush1.xpose.msra.mxu0 0.0
      %1444 = vmatprep.subr.mxu0 0.0
      %1445 = vmatpush1.xpose.msra.mxu0 0.0
      %1446 = vmatprep.subr.mxu0 0.0
      %1447 = vmatpush1.xpose.msra.mxu0 0.0
      %1448 = vmatprep.subr.mxu0 0.0
      %1449 = vmatpush1.xpose.msra.mxu0 0.0
      %1450 = vmatprep.subr.mxu0 0.0
      %1451 = vmatpush1.xpose.msra.mxu0 0.0
      %1452 = vmatprep.subr.mxu0 0.0
      %1453 = vmatpush1.xpose.msra.mxu0 0.0
      %1454 = vmatprep.subr.mxu0 0.0
      %1455 = vmatpush1.xpose.msra.mxu0 0.0
      %1456 = vmatprep.subr.mxu0 0.0
      %1457 = vmatpush1.xpose.msra.mxu0 0.0
      %1458 = vmatprep.subr.mxu0 0.0
      %1459 = vmatpush1.xpose.msra.mxu0 0.0
      %1460 = vmatprep.subr.mxu0 0.0
      %1461 = vmatpush1.xpose.msra.mxu0 0.0
      %1462 = vmatprep.subr.mxu0 0.0
      %1463 = vmatpush1.xpose.msra.mxu0 0.0
      %1464 = vmatprep.subr.mxu0 0.0
      %1465 = vmatpush1.xpose.msra.mxu0 0.0
      %1466 = vmatprep.mubr.f32.mxu0 0.0
      %1467 = vmatmul.mubr.f32.gmra.mrb[0].mxu0 %v1398
      %v1468 = vpop.f32.mrb[0].mxu0
      %v1469 = vadd.f32 0.0, %v1468
      %v1470 = vpop.f32.mrb[0].mxu0
      %1471 = vdwg.mxu0
      %v1472 = vcombine.low %v906, %v908
      %v1474 = vunpack.c.l.s4 1983009808
      %v1475 = vunpack.c.0.s8 %v1474
      %v1476 = vlaneseq
      %v1477 = vshrl.u32 %v1476, 7
      %v1478 = vsub.s32 %v1475, %v1477
      %v1479 = vrot.slane %v1472, %v1478
      %v1481 = vunpack.c.l.s4 1983009808
      %v1482 = vunpack.c.0.s8 %v1481
      %v1483 = vlaneseq
      %v1484 = vshrl.u32 %v1483, 7
      %v1485 = vsub.s32 %v1482, %v1484
      %v1486 = vrot.slane %v916, %v1485
      %v1487 = vcombine.low %v1479, %v1486
      %v1489 = vsel %vm440, %v584, 0
      %v1491 = vsel %vm440, %v1487, 0
      %1493 = vmatprep.subr.mxu0 0.0
      %1494 = vmatpush1.xpose.msra.mxu0 %v1491
      %1495 = vmatprep.subr.mxu0 0.0
      %1496 = vmatpush1.xpose.msra.mxu0 0.0
      %1497 = vmatprep.subr.mxu0 0.0
      %1498 = vmatpush1.xpose.msra.mxu0 0.0
      %1499 = vmatprep.subr.mxu0 0.0
      %1500 = vmatpush1.xpose.msra.mxu0 0.0
      %1501 = vmatprep.subr.mxu0 0.0
      %1502 = vmatpush1.xpose.msra.mxu0 0.0
      %1503 = vmatprep.subr.mxu0 0.0
      %1504 = vmatpush1.xpose.msra.mxu0 0.0
      %1505 = vmatprep.subr.mxu0 0.0
      %1506 = vmatpush1.xpose.msra.mxu0 0.0
      %1507 = vmatprep.subr.mxu0 0.0
      %1508 = vmatpush1.xpose.msra.mxu0 0.0
      %1509 = vmatprep.subr.mxu0 0.0
      %1510 = vmatpush1.xpose.msra.mxu0 0.0
      %1511 = vmatprep.subr.mxu0 0.0
      %1512 = vmatpush1.xpose.msra.mxu0 0.0
      %1513 = vmatprep.subr.mxu0 0.0
      %1514 = vmatpush1.xpose.msra.mxu0 0.0
      %1515 = vmatprep.subr.mxu0 0.0
      %1516 = vmatpush1.xpose.msra.mxu0 0.0
      %1517 = vmatprep.subr.mxu0 0.0
      %1518 = vmatpush1.xpose.msra.mxu0 0.0
      %1519 = vmatprep.subr.mxu0 0.0
      %1520 = vmatpush1.xpose.msra.mxu0 0.0
      %1521 = vmatprep.subr.mxu0 0.0
      %1522 = vmatpush1.xpose.msra.mxu0 0.0
      %1523 = vmatprep.subr.mxu0 0.0
      %1524 = vmatpush1.xpose.msra.mxu0 0.0
      %1525 = vmatprep.subr.mxu0 0.0
      %1526 = vmatpush1.xpose.msra.mxu0 0.0
      %1527 = vmatprep.subr.mxu0 0.0
      %1528 = vmatpush1.xpose.msra.mxu0 0.0
      %1529 = vmatprep.subr.mxu0 0.0
      %1530 = vmatpush1.xpose.msra.mxu0 0.0
      %1531 = vmatprep.subr.mxu0 0.0
      %1532 = vmatpush1.xpose.msra.mxu0 0.0
      %1533 = vmatprep.subr.mxu0 0.0
      %1534 = vmatpush1.xpose.msra.mxu0 0.0
      %1535 = vmatprep.subr.mxu0 0.0
      %1536 = vmatpush1.xpose.msra.mxu0 0.0
      %1537 = vmatprep.subr.mxu0 0.0
      %1538 = vmatpush1.xpose.msra.mxu0 0.0
      %1539 = vmatprep.subr.mxu0 0.0
      %1540 = vmatpush1.xpose.msra.mxu0 0.0
      %1541 = vmatprep.subr.mxu0 0.0
      %1542 = vmatpush1.xpose.msra.mxu0 0.0
      %1543 = vmatprep.subr.mxu0 0.0
      %1544 = vmatpush1.xpose.msra.mxu0 0.0
      %1545 = vmatprep.subr.mxu0 0.0
      %1546 = vmatpush1.xpose.msra.mxu0 0.0
      %1547 = vmatprep.subr.mxu0 0.0
      %1548 = vmatpush1.xpose.msra.mxu0 0.0
      %1549 = vmatprep.subr.mxu0 0.0
      %1550 = vmatpush1.xpose.msra.mxu0 0.0
      %1551 = vmatprep.subr.mxu0 0.0
      %1552 = vmatpush1.xpose.msra.mxu0 0.0
      %1553 = vmatprep.subr.mxu0 0.0
      %1554 = vmatpush1.xpose.msra.mxu0 0.0
      %1555 = vmatprep.subr.mxu0 0.0
      %1556 = vmatpush1.xpose.msra.mxu0 0.0
      %1557 = vmatprep.mubr.f32.mxu0 0.0
      %1558 = vmatmul.mubr.f32.gmra.mrb[0].mxu0 %v1489
      %v1559 = vpop.f32.mrb[0].mxu0
      %v1560 = vadd.f32 0.0, %v1559
      %v1561 = vpop.f32.mrb[0].mxu0
      %1562 = vdwg.mxu0
      %v1563 = vcombine.low %v924, %v923
      %v1565 = vunpack.c.l.s4 1983009808
      %v1566 = vunpack.c.0.s8 %v1565
      %v1567 = vlaneseq
      %v1568 = vshrl.u32 %v1567, 7
      %v1569 = vsub.s32 %v1566, %v1568
      %v1570 = vrot.slane %v1563, %v1569
      %v1572 = vunpack.c.l.s4 1983009808
      %v1573 = vunpack.c.0.s8 %v1572
      %v1574 = vlaneseq
      %v1575 = vshrl.u32 %v1574, 7
      %v1576 = vsub.s32 %v1573, %v1575
      %v1577 = vrot.slane %v925, %v1576
      %v1578 = vcombine.low %v1570, %v1577
      %v1580 = vsel %vm440, %v585, 0
      %v1582 = vsel %vm440, %v1578, 0
      %1584 = vmatprep.subr.mxu0 0.0
      %1585 = vmatpush1.xpose.msra.mxu0 %v1582
      %1586 = vmatprep.subr.mxu0 0.0
      %1587 = vmatpush1.xpose.msra.mxu0 0.0
      %1588 = vmatprep.subr.mxu0 0.0
      %1589 = vmatpush1.xpose.msra.mxu0 0.0
      %1590 = vmatprep.subr.mxu0 0.0
      %1591 = vmatpush1.xpose.msra.mxu0 0.0
      %1592 = vmatprep.subr.mxu0 0.0
      %1593 = vmatpush1.xpose.msra.mxu0 0.0
      %1594 = vmatprep.subr.mxu0 0.0
      %1595 = vmatpush1.xpose.msra.mxu0 0.0
      %1596 = vmatprep.subr.mxu0 0.0
      %1597 = vmatpush1.xpose.msra.mxu0 0.0
      %1598 = vmatprep.subr.mxu0 0.0
      %1599 = vmatpush1.xpose.msra.mxu0 0.0
      %1600 = vmatprep.subr.mxu0 0.0
      %1601 = vmatpush1.xpose.msra.mxu0 0.0
      %1602 = vmatprep.subr.mxu0 0.0
      %1603 = vmatpush1.xpose.msra.mxu0 0.0
      %1604 = vmatprep.subr.mxu0 0.0
      %1605 = vmatpush1.xpose.msra.mxu0 0.0
      %1606 = vmatprep.subr.mxu0 0.0
      %1607 = vmatpush1.xpose.msra.mxu0 0.0
      %1608 = vmatprep.subr.mxu0 0.0
      %1609 = vmatpush1.xpose.msra.mxu0 0.0
      %1610 = vmatprep.subr.mxu0 0.0
      %1611 = vmatpush1.xpose.msra.mxu0 0.0
      %1612 = vmatprep.subr.mxu0 0.0
      %1613 = vmatpush1.xpose.msra.mxu0 0.0
      %1614 = vmatprep.subr.mxu0 0.0
      %1615 = vmatpush1.xpose.msra.mxu0 0.0
      %1616 = vmatprep.subr.mxu0 0.0
      %1617 = vmatpush1.xpose.msra.mxu0 0.0
      %1618 = vmatprep.subr.mxu0 0.0
      %1619 = vmatpush1.xpose.msra.mxu0 0.0
      %1620 = vmatprep.subr.mxu0 0.0
      %1621 = vmatpush1.xpose.msra.mxu0 0.0
      %1622 = vmatprep.subr.mxu0 0.0
      %1623 = vmatpush1.xpose.msra.mxu0 0.0
      %1624 = vmatprep.subr.mxu0 0.0
      %1625 = vmatpush1.xpose.msra.mxu0 0.0
      %1626 = vmatprep.subr.mxu0 0.0
      %1627 = vmatpush1.xpose.msra.mxu0 0.0
      %1628 = vmatprep.subr.mxu0 0.0
      %1629 = vmatpush1.xpose.msra.mxu0 0.0
      %1630 = vmatprep.subr.mxu0 0.0
      %1631 = vmatpush1.xpose.msra.mxu0 0.0
      %1632 = vmatprep.subr.mxu0 0.0
      %1633 = vmatpush1.xpose.msra.mxu0 0.0
      %1634 = vmatprep.subr.mxu0 0.0
      %1635 = vmatpush1.xpose.msra.mxu0 0.0
      %1636 = vmatprep.subr.mxu0 0.0
      %1637 = vmatpush1.xpose.msra.mxu0 0.0
      %1638 = vmatprep.subr.mxu0 0.0
      %1639 = vmatpush1.xpose.msra.mxu0 0.0
      %1640 = vmatprep.subr.mxu0 0.0
      %1641 = vmatpush1.xpose.msra.mxu0 0.0
      %1642 = vmatprep.subr.mxu0 0.0
      %1643 = vmatpush1.xpose.msra.mxu0 0.0
      %1644 = vmatprep.subr.mxu0 0.0
      %1645 = vmatpush1.xpose.msra.mxu0 0.0
      %1646 = vmatprep.subr.mxu0 0.0
      %1647 = vmatpush1.xpose.msra.mxu0 0.0
      %1648 = vmatprep.mubr.f32.mxu0 0.0
      %1649 = vmatmul.mubr.f32.gmra.mrb[0].mxu0 %v1580
      %v1650 = vpop.f32.mrb[0].mxu0
      %v1651 = vadd.f32 0.0, %v1650
      %v1652 = vpop.f32.mrb[0].mxu0
      %1653 = vdwg.mxu0
      %vm1654 = vcmask 48128
      %1655 = vst.msk [vmem:[%s275] sm:$0xff] %vm1654, %v1014
      %1656 = vst.msk [vmem:[%s275 + $0x8] sm:$0xff] %vm1654, %v1105
      %1657 = vst.msk [vmem:[%s275 + $0x10] sm:$0xff] %vm1654, %v1196
      %1658 = vst.msk [vmem:[%s275 + $0x18] sm:$0xff] %vm1654, %v1287
      %1659 = vst.msk [vmem:[%s275 + $0x20] sm:$0xff] %vm1654, %v1378
      %1660 = vst.msk [vmem:[%s275 + $0x28] sm:$0xff] %vm1654, %v1469
      %1661 = vst.msk [vmem:[%s275 + $0x30] sm:$0xff] %vm1654, %v1560
      %1662 = vst.msk [vmem:[%s275 + $0x38] sm:$0xff] %vm1654, %v1651
      %s1663 = smul.u32 8, %s17
      %p1664 = scmp.lt.s32.totalorder %s1663, 15
      %s1665 = scalar_select %p1664, %s1663, 15
      %s1666 = smul.addr %s1665, 8
      %s1667 = scalar_lea.vmem %s6, %s1666
      // Predicated region
      $region45: #{actor_head_forward.1} parent=43 // pred_check
        %p1668 = pneg %p171
      $region46: #{actor_head_forward.1} parent=43 // pred_check_branch
        %1670 = sbr.rel (%p1668) target = $region48
      $region47: #{actor_head_forward.1} parent=43 // pred_region
        %s1671 = smul.u32 8, %s17
      $region48: #{actor_head_forward.1} parent=43 // pred_fallthru
        _
    $region44: #{actor_head_forward.1} parent=5 // pred_fallthru
      _
    %p1672 = scmp.le.s32.totalorder 2, %s12
    // Predicated region
    $region49: #{actor_head_forward.1} parent=5 // pred_check
      %p1673 = pneg %p1672
    $region50: #{actor_head_forward.1} parent=5 // pred_check_branch
      %1675 = sbr.rel (%p1673) target = $region52
    $region51: #{actor_head_forward.1} parent=5 // pred_region
      %s1676 = ssub.s32 %s12, 2
      // Predicated region
      $region53: #{actor_head_forward.1} parent=51 // pred_check
        %p1677 = pneg %p177
      $region54: #{actor_head_forward.1} parent=51 // pred_check_branch
        %1679 = sbr.rel (%p1677) target = $region56
      $region55: #{actor_head_forward.1} parent=51 // pred_region
        %s1680 = smul.u32 8, %s18
        %p1681 = scmp.lt.s32.totalorder %s1680, 15
        %s1682 = scalar_select %p1681, %s1680, 15
        %s1683 = smul.addr %s1682, 8
        %s1684 = scalar_lea.vmem %s6, %s1683
      $region56: #{actor_head_forward.1} parent=51 // pred_fallthru
        _
    $region52: #{actor_head_forward.1} parent=5 // pred_fallthru
      _
  $region6: #{actor_head_forward.1} parent=0 // loop_footer
    %s16 = sadd.s32 1, %s12
  $region7: #{actor_head_forward.1} parent=0 // loop_footer_branch
    %11 = sbr.rel target = $region3
  $region8: #{actor_head_forward.1} parent=0 // loop_exit
    _

</llo_original>
